<compile_context>
chip_gen: v6e
topology: v6e:2x2x1
jax: 0.10.0
libtpu: 0.0.40
codegen_flags: <defaults>
</compile_context>

<pallas_src>
import functools
import math

import jax
import jax.numpy as jnp
from jax.experimental import pallas as pl
from jax.experimental.pallas import tpu as pltpu

_LN_EPS = 1e-5


def _pick_vmem_limit():
    """Generation-aware VMEM budget: ~3/4 of physical, capped at 100 MiB.
    v7x (64 MiB) -> 48 MiB; v5e/v6e (128 MiB) -> 96 MiB."""
    cap = 64 * 1024 * 1024
    try:
        cap = int(getattr(pltpu.get_tpu_info(), "vmem_capacity_bytes", cap))
    except Exception:
        pass
    return int(min(cap * 3 // 4, 100 * 1024 * 1024))


_CPARAMS = pltpu.CompilerParams(
    dimension_semantics=("parallel",),        # shard the batch grid across TCs
    vmem_limit_bytes=_pick_vmem_limit(),
)


def _batched(tb, shape):
    """(tb, *shape) block selected by the batch grid index."""
    nd = len(shape)
    return pl.BlockSpec((tb,) + tuple(shape), lambda b: (b,) + (0,) * nd)


def _resident(shape):
    """Whole array; same block every grid step -> loaded into VMEM once."""
    return pl.BlockSpec(tuple(shape), lambda b: (0,) * len(shape))


def _ln(x, g, b):
    """LayerNorm over the last dim with f32 statistics."""
    mu = jnp.mean(x, axis=-1, keepdims=True)
    xc = x - mu
    var = jnp.mean(jnp.square(xc), axis=-1, keepdims=True)
    return xc * jax.lax.rsqrt(var + _LN_EPS) * g + b


def _choose_tb(batch, cap=4):
    """Largest batch block <= cap dividing `batch` that (when possible) keeps
    >= 2 grid steps so both v7x TensorCores get work."""
    tb = max(1, min(cap, batch // 2 if batch >= 2 else 1))
    while batch % tb:
        tb -= 1
    return tb


# ------------------------- stem: conv1 + embed + ln_pre ----------------------

def _stem_kernel(p_ref, w_ref, emb_ref, g_ref, b_ref, o_ref):
    TB, Np, CPP = p_ref.shape
    D = w_ref.shape[1]
    # patch projection (conv1 as matmul): bf16 operands, f32 accumulation.
    tok = jnp.dot(p_ref[...].reshape(TB * Np, CPP), w_ref[...],
                  preferred_element_type=jnp.float32).reshape(TB, Np, D)
    # [CLS] slot handled in-kernel; row 0 of `emb` already holds
    # class_embedding + positional_embedding[0].
    x = jnp.concatenate([jnp.zeros((TB, 1, D), jnp.float32), tok], axis=1)
    x = x + emb_ref[...]
    o_ref[...] = _ln(x, g_ref[...], b_ref[...]).astype(o_ref.dtype)


def stem(patches, w_patch, emb, ln_g, ln_b, *, tb):
    B, Np, CPP = patches.shape
    S, D = emb.shape
    return pl.pallas_call(
        _stem_kernel,
        out_shape=jax.ShapeDtypeStruct((B, S, D), jnp.float32),
        grid=(B // tb,),
        in_specs=[_batched(tb, (Np, CPP)), _resident((CPP, D)), _resident((S, D)),
                  _resident((1, D)), _resident((1, D))],
        out_specs=_batched(tb, (S, D)),
        compiler_params=_CPARAMS,
    )(patches, w_patch, emb, ln_g, ln_b)


# ----------------------- fused residual attention block ----------------------

def _block_kernel(h_ref, ln1g_ref, ln1b_ref, wqkv_ref, bqkv_ref,
                  wo_ref, bo_ref, ln2g_ref, ln2b_ref,
                  w1_ref, b1_ref, w2_ref, b2_ref, o_ref, *, n_heads):
    TB, S, D = h_ref.shape
    dh = D // n_heads
    h = h_ref[...].astype(jnp.float32).reshape(TB * S, D)   # residual stream (f32)

    # ---- attention: LN1 -> fused QKV matmul -> per-head softmax(qk^T)v ----
    y = _ln(h, ln1g_ref[...], ln1b_ref[...]).astype(jnp.bfloat16)
    qkv = jnp.dot(y, wqkv_ref[...],
                  preferred_element_type=jnp.float32) + bqkv_ref[...]   # (TB*S, 3D)
    # attention scale already folded into the Q slice of wqkv/bqkv.

    heads = []
    for hd in range(n_heads):                        # static unroll over heads
        lo = hd * dh
        qh = qkv[:, lo:lo + dh].reshape(TB, S, dh).astype(jnp.bfloat16)
        kh = qkv[:, D + lo:D + lo + dh].reshape(TB, S, dh).astype(jnp.bfloat16)
        vh = qkv[:, 2 * D + lo:2 * D + lo + dh].reshape(TB, S, dh).astype(jnp.bfloat16)
        s = jnp.einsum('bqd,bkd->bqk', qh, kh,
                       preferred_element_type=jnp.float32)              # (TB, S, S)
        s = s - jnp.max(s, axis=-1, keepdims=True)                      # f32 softmax
        p = jnp.exp(s)
        p = p * pl.reciprocal(jnp.sum(p, axis=-1, keepdims=True), approx=True)
        heads.append(jnp.einsum('bqk,bkd->bqd', p.astype(jnp.bfloat16), vh,
                                preferred_element_type=jnp.float32))    # (TB, S, dh)

    # concatenate heads -> one full-width out-projection matmul
    ctx = jnp.concatenate(heads, axis=-1).reshape(TB * S, D)
    att = jnp.dot(ctx.astype(jnp.bfloat16), wo_ref[...],
                  preferred_element_type=jnp.float32) + bo_ref[...]
    h1 = h + att                                                        # residual

    # ---- MLP: LN2 -> fc -> QuickGELU (f32) -> proj -> residual ----
    y2 = _ln(h1, ln2g_ref[...], ln2b_ref[...]).astype(jnp.bfloat16)
    m = jnp.dot(y2, w1_ref[...], preferred_element_type=jnp.float32) + b1_ref[...]
    m = m * jax.nn.sigmoid(1.702 * m)                                   # QuickGELU
    m = jnp.dot(m.astype(jnp.bfloat16), w2_ref[...],
                preferred_element_type=jnp.float32) + b2_ref[...]
    o_ref[...] = (h1 + m).reshape(TB, S, D).astype(o_ref.dtype)


def transformer_block(h, lyr, *, n_heads, tb):
    B, S, D = h.shape
    F = lyr["w1"].shape[1]
    kern = functools.partial(_block_kernel, n_heads=n_heads)
    return pl.pallas_call(
        kern,
        out_shape=jax.ShapeDtypeStruct((B, S, D), jnp.float32),
        grid=(B // tb,),
        in_specs=[
            _batched(tb, (S, D)),
            _resident((1, D)), _resident((1, D)),
            _resident((D, 3 * D)), _resident((1, 3 * D)),
            _resident((D, D)), _resident((1, D)),
            _resident((1, D)), _resident((1, D)),
            _resident((D, F)), _resident((1, F)),
            _resident((F, D)), _resident((1, D)),
        ],
        out_specs=_batched(tb, (S, D)),
        compiler_params=_CPARAMS,
    )(h, lyr["ln1_g"], lyr["ln1_b"], lyr["wqkv"], lyr["bqkv"],
      lyr["wo"], lyr["bo"], lyr["ln2_g"], lyr["ln2_b"],
      lyr["w1"], lyr["b1"], lyr["w2"], lyr["b2"])


# ------------------------------ head: ln_post + proj -------------------------

def _head_kernel(h_ref, g_ref, b_ref, w_ref, o_ref):
    TB, S, D = h_ref.shape
    O = w_ref.shape[1]
    y = _ln(h_ref[...].astype(jnp.float32).reshape(TB * S, D), g_ref[...], b_ref[...])
    o_ref[...] = jnp.dot(y.astype(jnp.bfloat16), w_ref[...],
                         preferred_element_type=jnp.float32
                         ).reshape(TB, S, O).astype(o_ref.dtype)


def head(h, ln_g, ln_b, proj, *, tb):
    B, S, D = h.shape
    O = proj.shape[1]
    return pl.pallas_call(
        _head_kernel,
        out_shape=jax.ShapeDtypeStruct((B, S, O), jnp.float32),
        grid=(B // tb,),
        in_specs=[_batched(tb, (S, D)), _resident((1, D)), _resident((1, D)),
                  _resident((D, O))],
        out_specs=_batched(tb, (S, O)),
        compiler_params=_CPARAMS,
    )(h, ln_g, ln_b, proj)


# --------------------------------- forward -----------------------------------

@functools.partial(jax.jit, static_argnames=("patch_size", "n_heads", "batch_block"))
def encoder_forward(x, params, *, patch_size, n_heads, batch_block=4):
    """x: (B, C, H, W) float32 (NCHW, PyTorch convention).  mask_ratio == 0."""
    B, C, H, W = x.shape
    P = patch_size
    Hp, Wp = H // P, W // P
    Np = Hp * Wp
    CPP = C * P * P
    tb = _choose_tb(B, batch_block)

    # conv1 (kernel=stride=P, no bias) == patch extraction + matmul (in stem kernel).
    # bf16 cast here halves the stem's HBM->VMEM input DMA; MXU operand is bf16 anyway.
    patches = (x.reshape(B, C, Hp, P, Wp, P)
                 .transpose(0, 2, 4, 1, 3, 5)
                 .reshape(B, Np, CPP)
                 .astype(jnp.bfloat16))

    # fused: patch projection + class/positional embedding + ln_pre
    h = stem(patches, params["w_patch"], params["emb"],
             params["ln_pre_g"], params["ln_pre_b"], tb=tb)

    # TODO(synk): random_masking (mask_ratio != 0) path not implemented.
    for lyr in params["layers"]:
        h = transformer_block(h, lyr, n_heads=n_heads, tb=tb)

    # fused: ln_post + x @ proj
    return head(h, params["ln_post_g"], params["ln_post_b"], params["proj"], tb=tb)


# ------------------------------- parameters ----------------------------------

def init_params_torch_layout(key, *, patch_size, in_ch, width, heads, layers,
                             mlp_dim, seq_len, out_dim):
    """Deterministic weights in the PyTorch module's native layout."""
    keys = iter(jax.random.split(key, 8 + 8 * layers))
    nrm = lambda k, shape, std=0.02: jax.random.normal(k, shape, jnp.float32) * std
    ones = lambda n: jnp.ones((n,), jnp.float32)
    zeros = lambda n: jnp.zeros((n,), jnp.float32)

    raw = {
        "conv1_w": nrm(next(keys), (width, in_ch, patch_size, patch_size)),
        "class_embedding": nrm(next(keys), (width,)),
        "positional_embedding": nrm(next(keys), (seq_len, width)),
        "ln_pre_g": ones(width), "ln_pre_b": zeros(width),
        "ln_post_g": ones(width), "ln_post_b": zeros(width),
        "proj": nrm(next(keys), (width, out_dim)),
        "layers": [],
    }
    for _ in range(layers):
        raw["layers"].append({
            "ln1_g": ones(width), "ln1_b": zeros(width),
            "in_proj_w": nrm(next(keys), (3 * width, width)),
            "in_proj_b": nrm(next(keys), (3 * width,)),
            "out_proj_w": nrm(next(keys), (width, width)),
            "out_proj_b": zeros(width),
            "ln2_g": ones(width), "ln2_b": zeros(width),
            "fc_w": nrm(next(keys), (mlp_dim, width)),
            "fc_b": nrm(next(keys), (mlp_dim,)),
            "proj_w": nrm(next(keys), (width, mlp_dim)),
            "proj_b": zeros(width),
        })
    return raw


def prepare_params(raw, *, heads):
    """One-time weight prep: fused/pre-transposed QKV, attention scale folded
    into the Q slice, bf16 MXU operands.  LN params / biases / embeddings f32."""
    D = raw["conv1_w"].shape[0]
    dh = D // heads
    scale = 1.0 / math.sqrt(dh)
    bf = lambda a: a.astype(jnp.bfloat16)
    row = lambda a: a.reshape(1, -1).astype(jnp.float32)

    params = {
        "w_patch": bf(raw["conv1_w"].reshape(D, -1).T),                    # (C*P*P, D)
        # row 0 of the positional embedding absorbs the class embedding
        "emb": raw["positional_embedding"].at[0].add(
            raw["class_embedding"]).astype(jnp.float32),                   # (S, D)
        "ln_pre_g": row(raw["ln_pre_g"]), "ln_pre_b": row(raw["ln_pre_b"]),
        "ln_post_g": row(raw["ln_post_g"]), "ln_post_b": row(raw["ln_post_b"]),
        "proj": bf(raw["proj"]),                                           # (D, out)
        "layers": [],
    }
    for lyr in raw["layers"]:
        wqkv = lyr["in_proj_w"].T                                          # (D, 3D)
        wqkv = wqkv.at[:, :D].multiply(scale)                              # fold 1/sqrt(dh)
        bqkv = lyr["in_proj_b"].at[:D].multiply(scale)                     # into Q slice
        params["layers"].append({
            "ln1_g": row(lyr["ln1_g"]), "ln1_b": row(lyr["ln1_b"]),
            "wqkv": bf(wqkv), "bqkv": row(bqkv),
            "wo": bf(lyr["out_proj_w"].T), "bo": row(lyr["out_proj_b"]),   # (D, D)
            "ln2_g": row(lyr["ln2_g"]), "ln2_b": row(lyr["ln2_b"]),
            "w1": bf(lyr["fc_w"].T), "b1": row(lyr["fc_b"]),               # (D, 4D)
            "w2": bf(lyr["proj_w"].T), "b2": row(lyr["proj_b"]),           # (4D, D)
        })
    return params


# ----------------------------------- main -------------------------------------

if __name__ == "__main__":
    B, C, IMG, P = 2, 3, 16, 8
    WIDTH, HEADS, LAYERS, MLP_DIM, OUT_DIM = 32, 4, 2, 128, 16
    SEQ = (IMG // P) * (IMG // P) + 1            # patches + [CLS]

    key = jax.random.PRNGKey(0)
    k_x, k_p = jax.random.split(key)
    x = jax.random.normal(k_x, (B, C, IMG, IMG), jnp.float32)
    raw = init_params_torch_layout(k_p, patch_size=P, in_ch=C, width=WIDTH,
                                   heads=HEADS, layers=LAYERS, mlp_dim=MLP_DIM,
                                   seq_len=SEQ, out_dim=OUT_DIM)
    params = prepare_params(raw, heads=HEADS)

    out = encoder_forward(x, params, patch_size=P, n_heads=HEADS)
    jax.block_until_ready(out)
    assert out.shape == (B, SEQ, OUT_DIM), out.shape
    assert bool(jnp.all(jnp.isfinite(out)))
    print("KERNEL_OK")
</pallas_src>

<mosaic_0001>
module attributes {stable_mosaic.version = 11 : i64} {
  func.func @_block_kernel(%arg0: i32, %arg1: memref<1x5x32xf32, #tpu.memory_space<vmem>>, %arg2: memref<1x32xf32, #tpu.memory_space<vmem>>, %arg3: memref<1x32xf32, #tpu.memory_space<vmem>>, %arg4: memref<32x96xbf16, #tpu.memory_space<vmem>>, %arg5: memref<1x96xf32, #tpu.memory_space<vmem>>, %arg6: memref<32x32xbf16, #tpu.memory_space<vmem>>, %arg7: memref<1x32xf32, #tpu.memory_space<vmem>>, %arg8: memref<1x32xf32, #tpu.memory_space<vmem>>, %arg9: memref<1x32xf32, #tpu.memory_space<vmem>>, %arg10: memref<32x128xbf16, #tpu.memory_space<vmem>>, %arg11: memref<1x128xf32, #tpu.memory_space<vmem>>, %arg12: memref<128x32xbf16, #tpu.memory_space<vmem>>, %arg13: memref<1x32xf32, #tpu.memory_space<vmem>>, %arg14: memref<1x5x32xf32, #tpu.memory_space<vmem>>) attributes {dimension_semantics = [#tpu.dimension_semantics<parallel>], iteration_bounds = array<i64: 2>, scalar_prefetch = 0 : i64, scratch_operands = 0 : i64, tpu.core_type = #tpu.core_type<tc>, window_params = [{transform_indices = @transform_0, window_bounds = array<i64: 1, 5, 32>}, {pipeline_mode = #tpu.pipeline_mode<synchronous>, transform_indices = @transform_1, window_bounds = array<i64: 1, 32>}, {pipeline_mode = #tpu.pipeline_mode<synchronous>, transform_indices = @transform_2, window_bounds = array<i64: 1, 32>}, {pipeline_mode = #tpu.pipeline_mode<synchronous>, transform_indices = @transform_3, window_bounds = array<i64: 32, 96>}, {pipeline_mode = #tpu.pipeline_mode<synchronous>, transform_indices = @transform_4, window_bounds = array<i64: 1, 96>}, {pipeline_mode = #tpu.pipeline_mode<synchronous>, transform_indices = @transform_5, window_bounds = array<i64: 32, 32>}, {pipeline_mode = #tpu.pipeline_mode<synchronous>, transform_indices = @transform_6, window_bounds = array<i64: 1, 32>}, {pipeline_mode = #tpu.pipeline_mode<synchronous>, transform_indices = @transform_7, window_bounds = array<i64: 1, 32>}, {pipeline_mode = #tpu.pipeline_mode<synchronous>, transform_indices = @transform_8, window_bounds = array<i64: 1, 32>}, {pipeline_mode = #tpu.pipeline_mode<synchronous>, transform_indices = @transform_9, window_bounds = array<i64: 32, 128>}, {pipeline_mode = #tpu.pipeline_mode<synchronous>, transform_indices = @transform_10, window_bounds = array<i64: 1, 128>}, {pipeline_mode = #tpu.pipeline_mode<synchronous>, transform_indices = @transform_11, window_bounds = array<i64: 128, 32>}, {pipeline_mode = #tpu.pipeline_mode<synchronous>, transform_indices = @transform_12, window_bounds = array<i64: 1, 32>}, {transform_indices = @transform_13, window_bounds = array<i64: 1, 5, 32>}]} {
    %c0 = arith.constant 0 : index
    %c0_0 = arith.constant 0 : index
    %c0_1 = arith.constant 0 : index
    %0 = vector.load %arg1[%c0, %c0_0, %c0_1] : memref<1x5x32xf32, #tpu.memory_space<vmem>>, vector<1x5x32xf32>
    %1 = vector.shape_cast %0 : vector<1x5x32xf32> to vector<5x32xf32>
    %c0_2 = arith.constant 0 : index
    %c0_3 = arith.constant 0 : index
    %2 = vector.load %arg2[%c0_2, %c0_3] : memref<1x32xf32, #tpu.memory_space<vmem>>, vector<1x32xf32>
    %c0_4 = arith.constant 0 : index
    %c0_5 = arith.constant 0 : index
    %3 = vector.load %arg3[%c0_4, %c0_5] : memref<1x32xf32, #tpu.memory_space<vmem>>, vector<1x32xf32>
    %cst = arith.constant dense<0.000000e+00> : vector<5xf32>
    %4 = vector.multi_reduction <add>, %1, %cst [1] : vector<5x32xf32> to vector<5xf32>
    %5 = vector.shape_cast %4 : vector<5xf32> to vector<5x1xf32>
    %cst_6 = arith.constant 3.200000e+01 : f32
    %6 = vector.broadcast %cst_6 : f32 to vector<5x1xf32>
    %7 = arith.divf %5, %6 : vector<5x1xf32>
    %8 = vector.broadcast %7 : vector<5x1xf32> to vector<5x32xf32>
    %9 = arith.subf %1, %8 : vector<5x32xf32>
    %10 = arith.mulf %9, %9 : vector<5x32xf32>
    %cst_7 = arith.constant dense<0.000000e+00> : vector<5xf32>
    %11 = vector.multi_reduction <add>, %10, %cst_7 [1] : vector<5x32xf32> to vector<5xf32>
    %12 = vector.shape_cast %11 : vector<5xf32> to vector<5x1xf32>
    %cst_8 = arith.constant 3.200000e+01 : f32
    %13 = vector.broadcast %cst_8 : f32 to vector<5x1xf32>
    %14 = arith.divf %12, %13 : vector<5x1xf32>
    %cst_9 = arith.constant 9.99999974E-6 : f32
    %15 = vector.broadcast %cst_9 : f32 to vector<5x1xf32>
    %16 = arith.addf %14, %15 : vector<5x1xf32>
    %17 = math.rsqrt %16 : vector<5x1xf32>
    %18 = vector.broadcast %17 : vector<5x1xf32> to vector<5x32xf32>
    %19 = arith.mulf %9, %18 : vector<5x32xf32>
    %20 = vector.broadcast %2 : vector<1x32xf32> to vector<5x32xf32>
    %21 = arith.mulf %19, %20 : vector<5x32xf32>
    %22 = vector.broadcast %3 : vector<1x32xf32> to vector<5x32xf32>
    %23 = arith.addf %21, %22 : vector<5x32xf32>
    %24 = arith.truncf %23 : vector<5x32xf32> to vector<5x32xbf16>
    %c0_10 = arith.constant 0 : index
    %c0_11 = arith.constant 0 : index
    %25 = vector.load %arg4[%c0_10, %c0_11] : memref<32x96xbf16, #tpu.memory_space<vmem>>, vector<32x96xbf16>
    %cst_12 = arith.constant dense<0.000000e+00> : vector<5x96xf32>
    %26 = tpu.matmul %24, %25, %cst_12 {dimension_numbers = #tpu.dot_dimension_numbers<[1], [0], [0], [1], [0, 0, 1, 1], [], []>} : vector<5x32xbf16>, vector<32x96xbf16>, vector<5x96xf32> -> vector<5x96xf32>
    %c0_13 = arith.constant 0 : index
    %c0_14 = arith.constant 0 : index
    %27 = vector.load %arg5[%c0_13, %c0_14] : memref<1x96xf32, #tpu.memory_space<vmem>>, vector<1x96xf32>
    %28 = vector.broadcast %27 : vector<1x96xf32> to vector<5x96xf32>
    %29 = arith.addf %26, %28 : vector<5x96xf32>
    %30 = vector.extract_strided_slice %29 {offsets = [0, 0], sizes = [5, 8], strides = [1, 1]} : vector<5x96xf32> to vector<5x8xf32>
    %31 = vector.shape_cast %30 : vector<5x8xf32> to vector<1x5x8xf32>
    %32 = arith.truncf %31 : vector<1x5x8xf32> to vector<1x5x8xbf16>
    %33 = vector.extract_strided_slice %29 {offsets = [0, 32], sizes = [5, 8], strides = [1, 1]} : vector<5x96xf32> to vector<5x8xf32>
    %34 = vector.shape_cast %33 : vector<5x8xf32> to vector<1x5x8xf32>
    %35 = arith.truncf %34 : vector<1x5x8xf32> to vector<1x5x8xbf16>
    %36 = vector.extract_strided_slice %29 {offsets = [0, 64], sizes = [5, 8], strides = [1, 1]} : vector<5x96xf32> to vector<5x8xf32>
    %37 = vector.shape_cast %36 : vector<5x8xf32> to vector<1x5x8xf32>
    %38 = arith.truncf %37 : vector<1x5x8xf32> to vector<1x5x8xbf16>
    "tpu.trace_start"() <{level = 10 : i32, message = "bqd,bkd->bqk"}> : () -> ()
    %cst_15 = arith.constant dense<0.000000e+00> : vector<1x5x5xf32>
    %39 = tpu.matmul %32, %35, %cst_15 {dimension_numbers = #tpu.dot_dimension_numbers<[2], [2], [1], [1], [0, 0, 0, 1, 1, 1], [0], [0]>} : vector<1x5x8xbf16>, vector<1x5x8xbf16>, vector<1x5x5xf32> -> vector<1x5x5xf32>
    "tpu.trace_stop"() : () -> ()
    %cst_16 = arith.constant dense<0xFF800000> : vector<1x5xf32>
    %40 = vector.multi_reduction <maximumf>, %39, %cst_16 [2] : vector<1x5x5xf32> to vector<1x5xf32>
    %41 = vector.shape_cast %40 : vector<1x5xf32> to vector<1x5x1xf32>
    %42 = vector.broadcast %41 : vector<1x5x1xf32> to vector<1x5x5xf32>
    %43 = arith.subf %39, %42 : vector<1x5x5xf32>
    %44 = math.exp %43 : vector<1x5x5xf32>
    %cst_17 = arith.constant dense<0.000000e+00> : vector<1x5xf32>
    %45 = vector.multi_reduction <add>, %44, %cst_17 [2] : vector<1x5x5xf32> to vector<1x5xf32>
    %46 = vector.shape_cast %45 : vector<1x5xf32> to vector<1x5x1xf32>
    %47 = tpu.reciprocal %46 {approx = true} : vector<1x5x1xf32> -> vector<1x5x1xf32>
    %48 = vector.broadcast %47 : vector<1x5x1xf32> to vector<1x5x5xf32>
    %49 = arith.mulf %44, %48 : vector<1x5x5xf32>
    %50 = arith.truncf %49 : vector<1x5x5xf32> to vector<1x5x5xbf16>
    "tpu.trace_start"() <{level = 10 : i32, message = "bqk,bkd->bqd"}> : () -> ()
    %cst_18 = arith.constant dense<0.000000e+00> : vector<1x5x8xf32>
    %51 = tpu.matmul %50, %38, %cst_18 {dimension_numbers = #tpu.dot_dimension_numbers<[2], [1], [1], [2], [0, 0, 0, 1, 1, 2], [0], [0]>} : vector<1x5x5xbf16>, vector<1x5x8xbf16>, vector<1x5x8xf32> -> vector<1x5x8xf32>
    "tpu.trace_stop"() : () -> ()
    %52 = vector.extract_strided_slice %29 {offsets = [0, 8], sizes = [5, 8], strides = [1, 1]} : vector<5x96xf32> to vector<5x8xf32>
    %53 = vector.shape_cast %52 : vector<5x8xf32> to vector<1x5x8xf32>
    %54 = arith.truncf %53 : vector<1x5x8xf32> to vector<1x5x8xbf16>
    %55 = vector.extract_strided_slice %29 {offsets = [0, 40], sizes = [5, 8], strides = [1, 1]} : vector<5x96xf32> to vector<5x8xf32>
    %56 = vector.shape_cast %55 : vector<5x8xf32> to vector<1x5x8xf32>
    %57 = arith.truncf %56 : vector<1x5x8xf32> to vector<1x5x8xbf16>
    %58 = vector.extract_strided_slice %29 {offsets = [0, 72], sizes = [5, 8], strides = [1, 1]} : vector<5x96xf32> to vector<5x8xf32>
    %59 = vector.shape_cast %58 : vector<5x8xf32> to vector<1x5x8xf32>
    %60 = arith.truncf %59 : vector<1x5x8xf32> to vector<1x5x8xbf16>
    "tpu.trace_start"() <{level = 10 : i32, message = "bqd,bkd->bqk"}> : () -> ()
    %cst_19 = arith.constant dense<0.000000e+00> : vector<1x5x5xf32>
    %61 = tpu.matmul %54, %57, %cst_19 {dimension_numbers = #tpu.dot_dimension_numbers<[2], [2], [1], [1], [0, 0, 0, 1, 1, 1], [0], [0]>} : vector<1x5x8xbf16>, vector<1x5x8xbf16>, vector<1x5x5xf32> -> vector<1x5x5xf32>
    "tpu.trace_stop"() : () -> ()
    %cst_20 = arith.constant dense<0xFF800000> : vector<1x5xf32>
    %62 = vector.multi_reduction <maximumf>, %61, %cst_20 [2] : vector<1x5x5xf32> to vector<1x5xf32>
    %63 = vector.shape_cast %62 : vector<1x5xf32> to vector<1x5x1xf32>
    %64 = vector.broadcast %63 : vector<1x5x1xf32> to vector<1x5x5xf32>
    %65 = arith.subf %61, %64 : vector<1x5x5xf32>
    %66 = math.exp %65 : vector<1x5x5xf32>
    %cst_21 = arith.constant dense<0.000000e+00> : vector<1x5xf32>
    %67 = vector.multi_reduction <add>, %66, %cst_21 [2] : vector<1x5x5xf32> to vector<1x5xf32>
    %68 = vector.shape_cast %67 : vector<1x5xf32> to vector<1x5x1xf32>
    %69 = tpu.reciprocal %68 {approx = true} : vector<1x5x1xf32> -> vector<1x5x1xf32>
    %70 = vector.broadcast %69 : vector<1x5x1xf32> to vector<1x5x5xf32>
    %71 = arith.mulf %66, %70 : vector<1x5x5xf32>
    %72 = arith.truncf %71 : vector<1x5x5xf32> to vector<1x5x5xbf16>
    "tpu.trace_start"() <{level = 10 : i32, message = "bqk,bkd->bqd"}> : () -> ()
    %cst_22 = arith.constant dense<0.000000e+00> : vector<1x5x8xf32>
    %73 = tpu.matmul %72, %60, %cst_22 {dimension_numbers = #tpu.dot_dimension_numbers<[2], [1], [1], [2], [0, 0, 0, 1, 1, 2], [0], [0]>} : vector<1x5x5xbf16>, vector<1x5x8xbf16>, vector<1x5x8xf32> -> vector<1x5x8xf32>
    "tpu.trace_stop"() : () -> ()
    %74 = vector.extract_strided_slice %29 {offsets = [0, 16], sizes = [5, 8], strides = [1, 1]} : vector<5x96xf32> to vector<5x8xf32>
    %75 = vector.shape_cast %74 : vector<5x8xf32> to vector<1x5x8xf32>
    %76 = arith.truncf %75 : vector<1x5x8xf32> to vector<1x5x8xbf16>
    %77 = vector.extract_strided_slice %29 {offsets = [0, 48], sizes = [5, 8], strides = [1, 1]} : vector<5x96xf32> to vector<5x8xf32>
    %78 = vector.shape_cast %77 : vector<5x8xf32> to vector<1x5x8xf32>
    %79 = arith.truncf %78 : vector<1x5x8xf32> to vector<1x5x8xbf16>
    %80 = vector.extract_strided_slice %29 {offsets = [0, 80], sizes = [5, 8], strides = [1, 1]} : vector<5x96xf32> to vector<5x8xf32>
    %81 = vector.shape_cast %80 : vector<5x8xf32> to vector<1x5x8xf32>
    %82 = arith.truncf %81 : vector<1x5x8xf32> to vector<1x5x8xbf16>
    "tpu.trace_start"() <{level = 10 : i32, message = "bqd,bkd->bqk"}> : () -> ()
    %cst_23 = arith.constant dense<0.000000e+00> : vector<1x5x5xf32>
    %83 = tpu.matmul %76, %79, %cst_23 {dimension_numbers = #tpu.dot_dimension_numbers<[2], [2], [1], [1], [0, 0, 0, 1, 1, 1], [0], [0]>} : vector<1x5x8xbf16>, vector<1x5x8xbf16>, vector<1x5x5xf32> -> vector<1x5x5xf32>
    "tpu.trace_stop"() : () -> ()
    %cst_24 = arith.constant dense<0xFF800000> : vector<1x5xf32>
    %84 = vector.multi_reduction <maximumf>, %83, %cst_24 [2] : vector<1x5x5xf32> to vector<1x5xf32>
    %85 = vector.shape_cast %84 : vector<1x5xf32> to vector<1x5x1xf32>
    %86 = vector.broadcast %85 : vector<1x5x1xf32> to vector<1x5x5xf32>
    %87 = arith.subf %83, %86 : vector<1x5x5xf32>
    %88 = math.exp %87 : vector<1x5x5xf32>
    %cst_25 = arith.constant dense<0.000000e+00> : vector<1x5xf32>
    %89 = vector.multi_reduction <add>, %88, %cst_25 [2] : vector<1x5x5xf32> to vector<1x5xf32>
    %90 = vector.shape_cast %89 : vector<1x5xf32> to vector<1x5x1xf32>
    %91 = tpu.reciprocal %90 {approx = true} : vector<1x5x1xf32> -> vector<1x5x1xf32>
    %92 = vector.broadcast %91 : vector<1x5x1xf32> to vector<1x5x5xf32>
    %93 = arith.mulf %88, %92 : vector<1x5x5xf32>
    %94 = arith.truncf %93 : vector<1x5x5xf32> to vector<1x5x5xbf16>
    "tpu.trace_start"() <{level = 10 : i32, message = "bqk,bkd->bqd"}> : () -> ()
    %cst_26 = arith.constant dense<0.000000e+00> : vector<1x5x8xf32>
    %95 = tpu.matmul %94, %82, %cst_26 {dimension_numbers = #tpu.dot_dimension_numbers<[2], [1], [1], [2], [0, 0, 0, 1, 1, 2], [0], [0]>} : vector<1x5x5xbf16>, vector<1x5x8xbf16>, vector<1x5x8xf32> -> vector<1x5x8xf32>
    "tpu.trace_stop"() : () -> ()
    %96 = vector.extract_strided_slice %29 {offsets = [0, 24], sizes = [5, 8], strides = [1, 1]} : vector<5x96xf32> to vector<5x8xf32>
    %97 = vector.shape_cast %96 : vector<5x8xf32> to vector<1x5x8xf32>
    %98 = arith.truncf %97 : vector<1x5x8xf32> to vector<1x5x8xbf16>
    %99 = vector.extract_strided_slice %29 {offsets = [0, 56], sizes = [5, 8], strides = [1, 1]} : vector<5x96xf32> to vector<5x8xf32>
    %100 = vector.shape_cast %99 : vector<5x8xf32> to vector<1x5x8xf32>
    %101 = arith.truncf %100 : vector<1x5x8xf32> to vector<1x5x8xbf16>
    %102 = vector.extract_strided_slice %29 {offsets = [0, 88], sizes = [5, 8], strides = [1, 1]} : vector<5x96xf32> to vector<5x8xf32>
    %103 = vector.shape_cast %102 : vector<5x8xf32> to vector<1x5x8xf32>
    %104 = arith.truncf %103 : vector<1x5x8xf32> to vector<1x5x8xbf16>
    "tpu.trace_start"() <{level = 10 : i32, message = "bqd,bkd->bqk"}> : () -> ()
    %cst_27 = arith.constant dense<0.000000e+00> : vector<1x5x5xf32>
    %105 = tpu.matmul %98, %101, %cst_27 {dimension_numbers = #tpu.dot_dimension_numbers<[2], [2], [1], [1], [0, 0, 0, 1, 1, 1], [0], [0]>} : vector<1x5x8xbf16>, vector<1x5x8xbf16>, vector<1x5x5xf32> -> vector<1x5x5xf32>
    "tpu.trace_stop"() : () -> ()
    %cst_28 = arith.constant dense<0xFF800000> : vector<1x5xf32>
    %106 = vector.multi_reduction <maximumf>, %105, %cst_28 [2] : vector<1x5x5xf32> to vector<1x5xf32>
    %107 = vector.shape_cast %106 : vector<1x5xf32> to vector<1x5x1xf32>
    %108 = vector.broadcast %107 : vector<1x5x1xf32> to vector<1x5x5xf32>
    %109 = arith.subf %105, %108 : vector<1x5x5xf32>
    %110 = math.exp %109 : vector<1x5x5xf32>
    %cst_29 = arith.constant dense<0.000000e+00> : vector<1x5xf32>
    %111 = vector.multi_reduction <add>, %110, %cst_29 [2] : vector<1x5x5xf32> to vector<1x5xf32>
    %112 = vector.shape_cast %111 : vector<1x5xf32> to vector<1x5x1xf32>
    %113 = tpu.reciprocal %112 {approx = true} : vector<1x5x1xf32> -> vector<1x5x1xf32>
    %114 = vector.broadcast %113 : vector<1x5x1xf32> to vector<1x5x5xf32>
    %115 = arith.mulf %110, %114 : vector<1x5x5xf32>
    %116 = arith.truncf %115 : vector<1x5x5xf32> to vector<1x5x5xbf16>
    "tpu.trace_start"() <{level = 10 : i32, message = "bqk,bkd->bqd"}> : () -> ()
    %cst_30 = arith.constant dense<0.000000e+00> : vector<1x5x8xf32>
    %117 = tpu.matmul %116, %104, %cst_30 {dimension_numbers = #tpu.dot_dimension_numbers<[2], [1], [1], [2], [0, 0, 0, 1, 1, 2], [0], [0]>} : vector<1x5x5xbf16>, vector<1x5x8xbf16>, vector<1x5x8xf32> -> vector<1x5x8xf32>
    "tpu.trace_stop"() : () -> ()
    %118 = tpu.concatenate %51, %73, %95, %117 in 2 : vector<1x5x8xf32>, vector<1x5x8xf32>, vector<1x5x8xf32>, vector<1x5x8xf32> -> vector<1x5x32xf32>
    %119 = vector.shape_cast %118 : vector<1x5x32xf32> to vector<5x32xf32>
    %120 = arith.truncf %119 : vector<5x32xf32> to vector<5x32xbf16>
    %c0_31 = arith.constant 0 : index
    %c0_32 = arith.constant 0 : index
    %121 = vector.load %arg6[%c0_31, %c0_32] : memref<32x32xbf16, #tpu.memory_space<vmem>>, vector<32x32xbf16>
    %cst_33 = arith.constant dense<0.000000e+00> : vector<5x32xf32>
    %122 = tpu.matmul %120, %121, %cst_33 {dimension_numbers = #tpu.dot_dimension_numbers<[1], [0], [0], [1], [0, 0, 1, 1], [], []>} : vector<5x32xbf16>, vector<32x32xbf16>, vector<5x32xf32> -> vector<5x32xf32>
    %c0_34 = arith.constant 0 : index
    %c0_35 = arith.constant 0 : index
    %123 = vector.load %arg7[%c0_34, %c0_35] : memref<1x32xf32, #tpu.memory_space<vmem>>, vector<1x32xf32>
    %124 = vector.broadcast %123 : vector<1x32xf32> to vector<5x32xf32>
    %125 = arith.addf %122, %124 : vector<5x32xf32>
    %126 = arith.addf %1, %125 : vector<5x32xf32>
    %c0_36 = arith.constant 0 : index
    %c0_37 = arith.constant 0 : index
    %127 = vector.load %arg8[%c0_36, %c0_37] : memref<1x32xf32, #tpu.memory_space<vmem>>, vector<1x32xf32>
    %c0_38 = arith.constant 0 : index
    %c0_39 = arith.constant 0 : index
    %128 = vector.load %arg9[%c0_38, %c0_39] : memref<1x32xf32, #tpu.memory_space<vmem>>, vector<1x32xf32>
    %cst_40 = arith.constant dense<0.000000e+00> : vector<5xf32>
    %129 = vector.multi_reduction <add>, %126, %cst_40 [1] : vector<5x32xf32> to vector<5xf32>
    %130 = vector.shape_cast %129 : vector<5xf32> to vector<5x1xf32>
    %cst_41 = arith.constant 3.200000e+01 : f32
    %131 = vector.broadcast %cst_41 : f32 to vector<5x1xf32>
    %132 = arith.divf %130, %131 : vector<5x1xf32>
    %133 = vector.broadcast %132 : vector<5x1xf32> to vector<5x32xf32>
    %134 = arith.subf %126, %133 : vector<5x32xf32>
    %135 = arith.mulf %134, %134 : vector<5x32xf32>
    %cst_42 = arith.constant dense<0.000000e+00> : vector<5xf32>
    %136 = vector.multi_reduction <add>, %135, %cst_42 [1] : vector<5x32xf32> to vector<5xf32>
    %137 = vector.shape_cast %136 : vector<5xf32> to vector<5x1xf32>
    %cst_43 = arith.constant 3.200000e+01 : f32
    %138 = vector.broadcast %cst_43 : f32 to vector<5x1xf32>
    %139 = arith.divf %137, %138 : vector<5x1xf32>
    %cst_44 = arith.constant 9.99999974E-6 : f32
    %140 = vector.broadcast %cst_44 : f32 to vector<5x1xf32>
    %141 = arith.addf %139, %140 : vector<5x1xf32>
    %142 = math.rsqrt %141 : vector<5x1xf32>
    %143 = vector.broadcast %142 : vector<5x1xf32> to vector<5x32xf32>
    %144 = arith.mulf %134, %143 : vector<5x32xf32>
    %145 = vector.broadcast %127 : vector<1x32xf32> to vector<5x32xf32>
    %146 = arith.mulf %144, %145 : vector<5x32xf32>
    %147 = vector.broadcast %128 : vector<1x32xf32> to vector<5x32xf32>
    %148 = arith.addf %146, %147 : vector<5x32xf32>
    %149 = arith.truncf %148 : vector<5x32xf32> to vector<5x32xbf16>
    %c0_45 = arith.constant 0 : index
    %c0_46 = arith.constant 0 : index
    %150 = vector.load %arg10[%c0_45, %c0_46] : memref<32x128xbf16, #tpu.memory_space<vmem>>, vector<32x128xbf16>
    %cst_47 = arith.constant dense<0.000000e+00> : vector<5x128xf32>
    %151 = tpu.matmul %149, %150, %cst_47 {dimension_numbers = #tpu.dot_dimension_numbers<[1], [0], [0], [1], [0, 0, 1, 1], [], []>} : vector<5x32xbf16>, vector<32x128xbf16>, vector<5x128xf32> -> vector<5x128xf32>
    %c0_48 = arith.constant 0 : index
    %c0_49 = arith.constant 0 : index
    %152 = vector.load %arg11[%c0_48, %c0_49] : memref<1x128xf32, #tpu.memory_space<vmem>>, vector<1x128xf32>
    %153 = vector.broadcast %152 : vector<1x128xf32> to vector<5x128xf32>
    %154 = arith.addf %151, %153 : vector<5x128xf32>
    %cst_50 = arith.constant 1.702000e+00 : f32
    %155 = vector.broadcast %cst_50 : f32 to vector<5x128xf32>
    %156 = arith.mulf %155, %154 : vector<5x128xf32>
    %157 = arith.negf %156 : vector<5x128xf32>
    %158 = math.exp %157 : vector<5x128xf32>
    %cst_51 = arith.constant 1.000000e+00 : f32
    %159 = vector.broadcast %cst_51 : f32 to vector<5x128xf32>
    %160 = arith.addf %159, %158 : vector<5x128xf32>
    %161 = arith.divf %159, %160 : vector<5x128xf32>
    %162 = arith.mulf %154, %161 : vector<5x128xf32>
    %163 = arith.truncf %162 : vector<5x128xf32> to vector<5x128xbf16>
    %c0_52 = arith.constant 0 : index
    %c0_53 = arith.constant 0 : index
    %164 = vector.load %arg12[%c0_52, %c0_53] : memref<128x32xbf16, #tpu.memory_space<vmem>>, vector<128x32xbf16>
    %cst_54 = arith.constant dense<0.000000e+00> : vector<5x32xf32>
    %165 = tpu.matmul %163, %164, %cst_54 {dimension_numbers = #tpu.dot_dimension_numbers<[1], [0], [0], [1], [0, 0, 1, 1], [], []>} : vector<5x128xbf16>, vector<128x32xbf16>, vector<5x32xf32> -> vector<5x32xf32>
    %c0_55 = arith.constant 0 : index
    %c0_56 = arith.constant 0 : index
    %166 = vector.load %arg13[%c0_55, %c0_56] : memref<1x32xf32, #tpu.memory_space<vmem>>, vector<1x32xf32>
    %167 = vector.broadcast %166 : vector<1x32xf32> to vector<5x32xf32>
    %168 = arith.addf %165, %167 : vector<5x32xf32>
    %169 = arith.addf %126, %168 : vector<5x32xf32>
    %170 = vector.shape_cast %169 : vector<5x32xf32> to vector<1x5x32xf32>
    %c0_57 = arith.constant 0 : index
    %c0_58 = arith.constant 0 : index
    %c0_59 = arith.constant 0 : index
    %171 = vector.load %arg14[%c0_57, %c0_58, %c0_59] : memref<1x5x32xf32, #tpu.memory_space<vmem>>, vector<1x5x32xf32>
    tpu.vector_store %arg14[%c0_57, %c0_58, %c0_59], %170 {strides = array<i32>} : memref<1x5x32xf32, #tpu.memory_space<vmem>>, vector<1x5x32xf32>,
    return
  }
  func.func @transform_0(%arg0: i32) -> (i32, i32, i32) {
    %c0_i32 = arith.constant 0 : i32
    %c0_i32_0 = arith.constant 0 : i32
    %c0_i32_1 = arith.constant 0 : i32
    return %arg0, %c0_i32, %c0_i32_0 : i32, i32, i32
  }
  func.func @transform_1(%arg0: i32) -> (i32, i32) {
    %c0_i32 = arith.constant 0 : i32
    %c0_i32_0 = arith.constant 0 : i32
    %c0_i32_1 = arith.constant 0 : i32
    return %c0_i32, %c0_i32_0 : i32, i32
  }
  func.func @transform_2(%arg0: i32) -> (i32, i32) {
    %c0_i32 = arith.constant 0 : i32
    %c0_i32_0 = arith.constant 0 : i32
    %c0_i32_1 = arith.constant 0 : i32
    return %c0_i32, %c0_i32_0 : i32, i32
  }
  func.func @transform_3(%arg0: i32) -> (i32, i32) {
    %c0_i32 = arith.constant 0 : i32
    %c0_i32_0 = arith.constant 0 : i32
    %c0_i32_1 = arith.constant 0 : i32
    return %c0_i32, %c0_i32_0 : i32, i32
  }
  func.func @transform_4(%arg0: i32) -> (i32, i32) {
    %c0_i32 = arith.constant 0 : i32
    %c0_i32_0 = arith.constant 0 : i32
    %c0_i32_1 = arith.constant 0 : i32
    return %c0_i32, %c0_i32_0 : i32, i32
  }
  func.func @transform_5(%arg0: i32) -> (i32, i32) {
    %c0_i32 = arith.constant 0 : i32
    %c0_i32_0 = arith.constant 0 : i32
    %c0_i32_1 = arith.constant 0 : i32
    return %c0_i32, %c0_i32_0 : i32, i32
  }
  func.func @transform_6(%arg0: i32) -> (i32, i32) {
    %c0_i32 = arith.constant 0 : i32
    %c0_i32_0 = arith.constant 0 : i32
    %c0_i32_1 = arith.constant 0 : i32
    return %c0_i32, %c0_i32_0 : i32, i32
  }
  func.func @transform_7(%arg0: i32) -> (i32, i32) {
    %c0_i32 = arith.constant 0 : i32
    %c0_i32_0 = arith.constant 0 : i32
    %c0_i32_1 = arith.constant 0 : i32
    return %c0_i32, %c0_i32_0 : i32, i32
  }
  func.func @transform_8(%arg0: i32) -> (i32, i32) {
    %c0_i32 = arith.constant 0 : i32
    %c0_i32_0 = arith.constant 0 : i32
    %c0_i32_1 = arith.constant 0 : i32
    return %c0_i32, %c0_i32_0 : i32, i32
  }
  func.func @transform_9(%arg0: i32) -> (i32, i32) {
    %c0_i32 = arith.constant 0 : i32
    %c0_i32_0 = arith.constant 0 : i32
    %c0_i32_1 = arith.constant 0 : i32
    return %c0_i32, %c0_i32_0 : i32, i32
  }
  func.func @transform_10(%arg0: i32) -> (i32, i32) {
    %c0_i32 = arith.constant 0 : i32
    %c0_i32_0 = arith.constant 0 : i32
    %c0_i32_1 = arith.constant 0 : i32
    return %c0_i32, %c0_i32_0 : i32, i32
  }
  func.func @transform_11(%arg0: i32) -> (i32, i32) {
    %c0_i32 = arith.constant 0 : i32
    %c0_i32_0 = arith.constant 0 : i32
    %c0_i32_1 = arith.constant 0 : i32
    return %c0_i32, %c0_i32_0 : i32, i32
  }
  func.func @transform_12(%arg0: i32) -> (i32, i32) {
    %c0_i32 = arith.constant 0 : i32
    %c0_i32_0 = arith.constant 0 : i32
    %c0_i32_1 = arith.constant 0 : i32
    return %c0_i32, %c0_i32_0 : i32, i32
  }
  func.func @transform_13(%arg0: i32) -> (i32, i32, i32) {
    %c0_i32 = arith.constant 0 : i32
    %c0_i32_0 = arith.constant 0 : i32
    %c0_i32_1 = arith.constant 0 : i32
    return %arg0, %c0_i32, %c0_i32_0 : i32, i32, i32
  }
}

module attributes {stable_mosaic.version = 11 : i64} {
  func.func @_stem_kernel(%arg0: i32, %arg1: memref<1x4x192xbf16, #tpu.memory_space<vmem>>, %arg2: memref<192x32xbf16, #tpu.memory_space<vmem>>, %arg3: memref<5x32xf32, #tpu.memory_space<vmem>>, %arg4: memref<1x32xf32, #tpu.memory_space<vmem>>, %arg5: memref<1x32xf32, #tpu.memory_space<vmem>>, %arg6: memref<1x5x32xf32, #tpu.memory_space<vmem>>) attributes {dimension_semantics = [#tpu.dimension_semantics<parallel>], iteration_bounds = array<i64: 2>, scalar_prefetch = 0 : i64, scratch_operands = 0 : i64, tpu.core_type = #tpu.core_type<tc>, window_params = [{transform_indices = @transform_0, window_bounds = array<i64: 1, 4, 192>}, {pipeline_mode = #tpu.pipeline_mode<synchronous>, transform_indices = @transform_1, window_bounds = array<i64: 192, 32>}, {pipeline_mode = #tpu.pipeline_mode<synchronous>, transform_indices = @transform_2, window_bounds = array<i64: 5, 32>}, {pipeline_mode = #tpu.pipeline_mode<synchronous>, transform_indices = @transform_3, window_bounds = array<i64: 1, 32>}, {pipeline_mode = #tpu.pipeline_mode<synchronous>, transform_indices = @transform_4, window_bounds = array<i64: 1, 32>}, {transform_indices = @transform_5, window_bounds = array<i64: 1, 5, 32>}]} {
    %c0 = arith.constant 0 : index
    %c0_0 = arith.constant 0 : index
    %c0_1 = arith.constant 0 : index
    %0 = vector.load %arg1[%c0, %c0_0, %c0_1] : memref<1x4x192xbf16, #tpu.memory_space<vmem>>, vector<1x4x192xbf16>
    %1 = vector.shape_cast %0 : vector<1x4x192xbf16> to vector<4x192xbf16>
    %c0_2 = arith.constant 0 : index
    %c0_3 = arith.constant 0 : index
    %2 = vector.load %arg2[%c0_2, %c0_3] : memref<192x32xbf16, #tpu.memory_space<vmem>>, vector<192x32xbf16>
    %cst = arith.constant dense<0.000000e+00> : vector<4x32xf32>
    %3 = tpu.matmul %1, %2, %cst {dimension_numbers = #tpu.dot_dimension_numbers<[1], [0], [0], [1], [0, 0, 1, 1], [], []>} : vector<4x192xbf16>, vector<192x32xbf16>, vector<4x32xf32> -> vector<4x32xf32>
    %4 = vector.shape_cast %3 : vector<4x32xf32> to vector<1x4x32xf32>
    %cst_4 = arith.constant 0.000000e+00 : f32
    %5 = vector.broadcast %cst_4 : f32 to vector<1x1x32xf32>
    %6 = tpu.concatenate %5, %4 in 1 : vector<1x1x32xf32>, vector<1x4x32xf32> -> vector<1x5x32xf32>
    %c0_5 = arith.constant 0 : index
    %c0_6 = arith.constant 0 : index
    %7 = vector.load %arg3[%c0_5, %c0_6] : memref<5x32xf32, #tpu.memory_space<vmem>>, vector<5x32xf32>
    %8 = vector.shape_cast %7 : vector<5x32xf32> to vector<1x5x32xf32>
    %9 = arith.addf %6, %8 : vector<1x5x32xf32>
    %c0_7 = arith.constant 0 : index
    %c0_8 = arith.constant 0 : index
    %10 = vector.load %arg4[%c0_7, %c0_8] : memref<1x32xf32, #tpu.memory_space<vmem>>, vector<1x32xf32>
    %c0_9 = arith.constant 0 : index
    %c0_10 = arith.constant 0 : index
    %11 = vector.load %arg5[%c0_9, %c0_10] : memref<1x32xf32, #tpu.memory_space<vmem>>, vector<1x32xf32>
    %cst_11 = arith.constant dense<0.000000e+00> : vector<1x5xf32>
    %12 = vector.multi_reduction <add>, %9, %cst_11 [2] : vector<1x5x32xf32> to vector<1x5xf32>
    %13 = vector.shape_cast %12 : vector<1x5xf32> to vector<1x5x1xf32>
    %cst_12 = arith.constant 3.200000e+01 : f32
    %14 = vector.broadcast %cst_12 : f32 to vector<1x5x1xf32>
    %15 = arith.divf %13, %14 : vector<1x5x1xf32>
    %16 = vector.broadcast %15 : vector<1x5x1xf32> to vector<1x5x32xf32>
    %17 = arith.subf %9, %16 : vector<1x5x32xf32>
    %18 = arith.mulf %17, %17 : vector<1x5x32xf32>
    %cst_13 = arith.constant dense<0.000000e+00> : vector<1x5xf32>
    %19 = vector.multi_reduction <add>, %18, %cst_13 [2] : vector<1x5x32xf32> to vector<1x5xf32>
    %20 = vector.shape_cast %19 : vector<1x5xf32> to vector<1x5x1xf32>
    %cst_14 = arith.constant 3.200000e+01 : f32
    %21 = vector.broadcast %cst_14 : f32 to vector<1x5x1xf32>
    %22 = arith.divf %20, %21 : vector<1x5x1xf32>
    %cst_15 = arith.constant 9.99999974E-6 : f32
    %23 = vector.broadcast %cst_15 : f32 to vector<1x5x1xf32>
    %24 = arith.addf %22, %23 : vector<1x5x1xf32>
    %25 = math.rsqrt %24 : vector<1x5x1xf32>
    %26 = vector.broadcast %25 : vector<1x5x1xf32> to vector<1x5x32xf32>
    %27 = arith.mulf %17, %26 : vector<1x5x32xf32>
    %28 = vector.shape_cast %10 : vector<1x32xf32> to vector<1x1x32xf32>
    %29 = vector.broadcast %28 : vector<1x1x32xf32> to vector<1x5x32xf32>
    %30 = arith.mulf %27, %29 : vector<1x5x32xf32>
    %31 = vector.shape_cast %11 : vector<1x32xf32> to vector<1x1x32xf32>
    %32 = vector.broadcast %31 : vector<1x1x32xf32> to vector<1x5x32xf32>
    %33 = arith.addf %30, %32 : vector<1x5x32xf32>
    %c0_16 = arith.constant 0 : index
    %c0_17 = arith.constant 0 : index
    %c0_18 = arith.constant 0 : index
    %34 = vector.load %arg6[%c0_16, %c0_17, %c0_18] : memref<1x5x32xf32, #tpu.memory_space<vmem>>, vector<1x5x32xf32>
    tpu.vector_store %arg6[%c0_16, %c0_17, %c0_18], %33 {strides = array<i32>} : memref<1x5x32xf32, #tpu.memory_space<vmem>>, vector<1x5x32xf32>,
    return
  }
  func.func @transform_0(%arg0: i32) -> (i32, i32, i32) {
    %c0_i32 = arith.constant 0 : i32
    %c0_i32_0 = arith.constant 0 : i32
    %c0_i32_1 = arith.constant 0 : i32
    return %arg0, %c0_i32, %c0_i32_0 : i32, i32, i32
  }
  func.func @transform_1(%arg0: i32) -> (i32, i32) {
    %c0_i32 = arith.constant 0 : i32
    %c0_i32_0 = arith.constant 0 : i32
    %c0_i32_1 = arith.constant 0 : i32
    return %c0_i32, %c0_i32_0 : i32, i32
  }
  func.func @transform_2(%arg0: i32) -> (i32, i32) {
    %c0_i32 = arith.constant 0 : i32
    %c0_i32_0 = arith.constant 0 : i32
    %c0_i32_1 = arith.constant 0 : i32
    return %c0_i32, %c0_i32_0 : i32, i32
  }
  func.func @transform_3(%arg0: i32) -> (i32, i32) {
    %c0_i32 = arith.constant 0 : i32
    %c0_i32_0 = arith.constant 0 : i32
    %c0_i32_1 = arith.constant 0 : i32
    return %c0_i32, %c0_i32_0 : i32, i32
  }
  func.func @transform_4(%arg0: i32) -> (i32, i32) {
    %c0_i32 = arith.constant 0 : i32
    %c0_i32_0 = arith.constant 0 : i32
    %c0_i32_1 = arith.constant 0 : i32
    return %c0_i32, %c0_i32_0 : i32, i32
  }
  func.func @transform_5(%arg0: i32) -> (i32, i32, i32) {
    %c0_i32 = arith.constant 0 : i32
    %c0_i32_0 = arith.constant 0 : i32
    %c0_i32_1 = arith.constant 0 : i32
    return %arg0, %c0_i32, %c0_i32_0 : i32, i32, i32
  }
}

module attributes {stable_mosaic.version = 11 : i64} {
  func.func @_head_kernel(%arg0: i32, %arg1: memref<1x5x32xf32, #tpu.memory_space<vmem>>, %arg2: memref<1x32xf32, #tpu.memory_space<vmem>>, %arg3: memref<1x32xf32, #tpu.memory_space<vmem>>, %arg4: memref<32x16xbf16, #tpu.memory_space<vmem>>, %arg5: memref<1x5x16xf32, #tpu.memory_space<vmem>>) attributes {dimension_semantics = [#tpu.dimension_semantics<parallel>], iteration_bounds = array<i64: 2>, scalar_prefetch = 0 : i64, scratch_operands = 0 : i64, tpu.core_type = #tpu.core_type<tc>, window_params = [{transform_indices = @transform_0, window_bounds = array<i64: 1, 5, 32>}, {pipeline_mode = #tpu.pipeline_mode<synchronous>, transform_indices = @transform_1, window_bounds = array<i64: 1, 32>}, {pipeline_mode = #tpu.pipeline_mode<synchronous>, transform_indices = @transform_2, window_bounds = array<i64: 1, 32>}, {pipeline_mode = #tpu.pipeline_mode<synchronous>, transform_indices = @transform_3, window_bounds = array<i64: 32, 16>}, {transform_indices = @transform_4, window_bounds = array<i64: 1, 5, 16>}]} {
    %c0 = arith.constant 0 : index
    %c0_0 = arith.constant 0 : index
    %c0_1 = arith.constant 0 : index
    %0 = vector.load %arg1[%c0, %c0_0, %c0_1] : memref<1x5x32xf32, #tpu.memory_space<vmem>>, vector<1x5x32xf32>
    %1 = vector.shape_cast %0 : vector<1x5x32xf32> to vector<5x32xf32>
    %c0_2 = arith.constant 0 : index
    %c0_3 = arith.constant 0 : index
    %2 = vector.load %arg2[%c0_2, %c0_3] : memref<1x32xf32, #tpu.memory_space<vmem>>, vector<1x32xf32>
    %c0_4 = arith.constant 0 : index
    %c0_5 = arith.constant 0 : index
    %3 = vector.load %arg3[%c0_4, %c0_5] : memref<1x32xf32, #tpu.memory_space<vmem>>, vector<1x32xf32>
    %cst = arith.constant dense<0.000000e+00> : vector<5xf32>
    %4 = vector.multi_reduction <add>, %1, %cst [1] : vector<5x32xf32> to vector<5xf32>
    %5 = vector.shape_cast %4 : vector<5xf32> to vector<5x1xf32>
    %cst_6 = arith.constant 3.200000e+01 : f32
    %6 = vector.broadcast %cst_6 : f32 to vector<5x1xf32>
    %7 = arith.divf %5, %6 : vector<5x1xf32>
    %8 = vector.broadcast %7 : vector<5x1xf32> to vector<5x32xf32>
    %9 = arith.subf %1, %8 : vector<5x32xf32>
    %10 = arith.mulf %9, %9 : vector<5x32xf32>
    %cst_7 = arith.constant dense<0.000000e+00> : vector<5xf32>
    %11 = vector.multi_reduction <add>, %10, %cst_7 [1] : vector<5x32xf32> to vector<5xf32>
    %12 = vector.shape_cast %11 : vector<5xf32> to vector<5x1xf32>
    %cst_8 = arith.constant 3.200000e+01 : f32
    %13 = vector.broadcast %cst_8 : f32 to vector<5x1xf32>
    %14 = arith.divf %12, %13 : vector<5x1xf32>
    %cst_9 = arith.constant 9.99999974E-6 : f32
    %15 = vector.broadcast %cst_9 : f32 to vector<5x1xf32>
    %16 = arith.addf %14, %15 : vector<5x1xf32>
    %17 = math.rsqrt %16 : vector<5x1xf32>
    %18 = vector.broadcast %17 : vector<5x1xf32> to vector<5x32xf32>
    %19 = arith.mulf %9, %18 : vector<5x32xf32>
    %20 = vector.broadcast %2 : vector<1x32xf32> to vector<5x32xf32>
    %21 = arith.mulf %19, %20 : vector<5x32xf32>
    %22 = vector.broadcast %3 : vector<1x32xf32> to vector<5x32xf32>
    %23 = arith.addf %21, %22 : vector<5x32xf32>
    %24 = arith.truncf %23 : vector<5x32xf32> to vector<5x32xbf16>
    %c0_10 = arith.constant 0 : index
    %c0_11 = arith.constant 0 : index
    %25 = vector.load %arg4[%c0_10, %c0_11] : memref<32x16xbf16, #tpu.memory_space<vmem>>, vector<32x16xbf16>
    %cst_12 = arith.constant dense<0.000000e+00> : vector<5x16xf32>
    %26 = tpu.matmul %24, %25, %cst_12 {dimension_numbers = #tpu.dot_dimension_numbers<[1], [0], [0], [1], [0, 0, 1, 1], [], []>} : vector<5x32xbf16>, vector<32x16xbf16>, vector<5x16xf32> -> vector<5x16xf32>
    %27 = vector.shape_cast %26 : vector<5x16xf32> to vector<1x5x16xf32>
    %c0_13 = arith.constant 0 : index
    %c0_14 = arith.constant 0 : index
    %c0_15 = arith.constant 0 : index
    %28 = vector.load %arg5[%c0_13, %c0_14, %c0_15] : memref<1x5x16xf32, #tpu.memory_space<vmem>>, vector<1x5x16xf32>
    tpu.vector_store %arg5[%c0_13, %c0_14, %c0_15], %27 {strides = array<i32>} : memref<1x5x16xf32, #tpu.memory_space<vmem>>, vector<1x5x16xf32>,
    return
  }
  func.func @transform_0(%arg0: i32) -> (i32, i32, i32) {
    %c0_i32 = arith.constant 0 : i32
    %c0_i32_0 = arith.constant 0 : i32
    %c0_i32_1 = arith.constant 0 : i32
    return %arg0, %c0_i32, %c0_i32_0 : i32, i32, i32
  }
  func.func @transform_1(%arg0: i32) -> (i32, i32) {
    %c0_i32 = arith.constant 0 : i32
    %c0_i32_0 = arith.constant 0 : i32
    %c0_i32_1 = arith.constant 0 : i32
    return %c0_i32, %c0_i32_0 : i32, i32
  }
  func.func @transform_2(%arg0: i32) -> (i32, i32) {
    %c0_i32 = arith.constant 0 : i32
    %c0_i32_0 = arith.constant 0 : i32
    %c0_i32_1 = arith.constant 0 : i32
    return %c0_i32, %c0_i32_0 : i32, i32
  }
  func.func @transform_3(%arg0: i32) -> (i32, i32) {
    %c0_i32 = arith.constant 0 : i32
    %c0_i32_0 = arith.constant 0 : i32
    %c0_i32_1 = arith.constant 0 : i32
    return %c0_i32, %c0_i32_0 : i32, i32
  }
  func.func @transform_4(%arg0: i32) -> (i32, i32, i32) {
    %c0_i32 = arith.constant 0 : i32
    %c0_i32_0 = arith.constant 0 : i32
    %c0_i32_1 = arith.constant 0 : i32
    return %arg0, %c0_i32, %c0_i32_0 : i32, i32, i32
  }
}

</mosaic_0001>

<llo_original>
// kernel: encoder_forward.7
$region0: #{encoder_forward.7}
  #allocation0 [shape = 'u32[]', space=smem, size = 0x4, offset = 0x4, fixed_abs, tag = 'smem constant byte address 0x4 - core index']
  #allocation1 [shape = 'u32[144,128]{1,0:T(1,128)}', space=vmem, size = 0x12000, scoped, tag = 'internal scratch']
  %s0 = inlined_call_operand.vmem [shape: f32[2,5,32], index: 0, kind: input, shape index: {}]
  %s1 = inlined_call_operand.vmem [shape: f32[1,32], index: 1, kind: input, shape index: {}]
  %s2 = inlined_call_operand.vmem [shape: f32[1,32], index: 2, kind: input, shape index: {}]
  %s3 = inlined_call_operand.vmem [shape: bf16[32,16], index: 3, kind: input, shape index: {}]
  %s4 = inlined_call_operand.vmem [shape: f32[2,5,16], index: 4, kind: output, shape index: {}]
  %s5 = sld [smem:[#allocation0]]
  $region49: #{encoder_forward.7} parent=0
    _
  %s7 = ssub.s32 1, %s5
  %s8 = scalar_select 0, %s7, %s5
  loop: start=0, step=1, limit=4
  $region2: #{encoder_forward.7} parent=0 // loop_pre_header
    _
  $region3: #{encoder_forward.7} parent=0 // loop_header
    %s10 = sphi 0, %s14
    %p11 = scmp.ge.s32.totalorder %s10, 4
    %s20 = sphi 0, %s22
    %s23 = sphi 0, %s20
    %s24 = sphi 0, %s23
    %s40 = sphi 0, %s24
    %s44 = sphi 0, %s44
    %s46 = sphi 0, %s44
    %s47 = sphi 0, %s46
    %s61 = sphi 0, %s47
    %s65 = sphi 0, %s65
    %s67 = sphi 0, %s65
    %s68 = sphi 0, %s67
    %s82 = sphi 0, %s68
    %s86 = sphi 0, %s86
    %s88 = sphi 0, %s86
    %s89 = sphi 0, %s88
    %s103 = sphi 0, %s89
    %s109 = sphi 0, %s111
    %s112 = sphi 0, %s109
    %s113 = sphi 0, %s112
    %s129 = sphi 0, %s113
  $region4: #{encoder_forward.7} parent=0 // loop_header_branch
    %13 = sbr.rel (%p11) target = $region8
  $region5: #{encoder_forward.7} parent=0 // loop_body
    %s15 = ssub.s32 %s10, 1
    %s16 = ssub.s32 %s10, 2
    %s17 = sadd.s32 %s10, 1
    %s18 = ssub.s32 %s10, %s17
    %p19 = scmp.eq.s32.totalorder %s18, 0
    %s21 = sadd.s32 %s20, 1
    %s22 = scalar_select %p19, %s20, %s21
    %p25 = pneg %p19
    %p26 = scmp.eq.s32.totalorder %s10, 1
    %p27 = por %p25, %p26
    %p28 = scmp.ne.s32.totalorder %s20, %s23
    %p29 = scmp.eq.s32.totalorder %s10, 0
    %p30 = por %p28, %p29
    %p31 = scmp.ne.s32.totalorder %s20, %s23
    %p32 = scmp.eq.s32.totalorder %s15, 1
    %p33 = por %p31, %p32
    %p34 = scmp.ne.s32.totalorder %s23, %s24
    %p35 = scmp.eq.s32.totalorder %s15, 0
    %p36 = por %p34, %p35
    %p37 = scmp.ne.s32.totalorder %s23, %s24
    %p38 = scmp.eq.s32.totalorder %s16, 1
    %p39 = por %p37, %p38
    %p41 = scmp.ne.s32.totalorder %s24, %s40
    %p42 = scmp.eq.s32.totalorder %s16, 0
    %p43 = por %p41, %p42
    %s45 = sadd.s32 %s44, 1
    %p48 = scmp.eq.s32.totalorder %s10, 1
    %p49 = scmp.ne.s32.totalorder %s44, %s46
    %p50 = scmp.eq.s32.totalorder %s10, 0
    %p51 = por %p49, %p50
    %p52 = scmp.ne.s32.totalorder %s44, %s46
    %p53 = scmp.eq.s32.totalorder %s15, 1
    %p54 = por %p52, %p53
    %p55 = scmp.ne.s32.totalorder %s46, %s47
    %p56 = scmp.eq.s32.totalorder %s15, 0
    %p57 = por %p55, %p56
    %p58 = scmp.ne.s32.totalorder %s46, %s47
    %p59 = scmp.eq.s32.totalorder %s16, 1
    %p60 = por %p58, %p59
    %p62 = scmp.ne.s32.totalorder %s47, %s61
    %p63 = scmp.eq.s32.totalorder %s16, 0
    %p64 = por %p62, %p63
    %s66 = sadd.s32 %s65, 1
    %p69 = scmp.eq.s32.totalorder %s10, 1
    %p70 = scmp.ne.s32.totalorder %s65, %s67
    %p71 = scmp.eq.s32.totalorder %s10, 0
    %p72 = por %p70, %p71
    %p73 = scmp.ne.s32.totalorder %s65, %s67
    %p74 = scmp.eq.s32.totalorder %s15, 1
    %p75 = por %p73, %p74
    %p76 = scmp.ne.s32.totalorder %s67, %s68
    %p77 = scmp.eq.s32.totalorder %s15, 0
    %p78 = por %p76, %p77
    %p79 = scmp.ne.s32.totalorder %s67, %s68
    %p80 = scmp.eq.s32.totalorder %s16, 1
    %p81 = por %p79, %p80
    %p83 = scmp.ne.s32.totalorder %s68, %s82
    %p84 = scmp.eq.s32.totalorder %s16, 0
    %p85 = por %p83, %p84
    %s87 = sadd.s32 %s86, 1
    %p90 = scmp.eq.s32.totalorder %s10, 1
    %p91 = scmp.ne.s32.totalorder %s86, %s88
    %p92 = scmp.eq.s32.totalorder %s10, 0
    %p93 = por %p91, %p92
    %p94 = scmp.ne.s32.totalorder %s86, %s88
    %p95 = scmp.eq.s32.totalorder %s15, 1
    %p96 = por %p94, %p95
    %p97 = scmp.ne.s32.totalorder %s88, %s89
    %p98 = scmp.eq.s32.totalorder %s15, 0
    %p99 = por %p97, %p98
    %p100 = scmp.ne.s32.totalorder %s88, %s89
    %p101 = scmp.eq.s32.totalorder %s16, 1
    %p102 = por %p100, %p101
    %p104 = scmp.ne.s32.totalorder %s89, %s103
    %p105 = scmp.eq.s32.totalorder %s16, 0
    %p106 = por %p104, %p105
    %s107 = ssub.s32 %s10, %s17
    %p108 = scmp.eq.s32.totalorder %s107, 0
    %s110 = sadd.s32 %s109, 1
    %s111 = scalar_select %p108, %s109, %s110
    %p114 = pneg %p108
    %p115 = scmp.eq.s32.totalorder %s10, 1
    %p116 = por %p114, %p115
    %p117 = scmp.ne.s32.totalorder %s109, %s112
    %p118 = scmp.eq.s32.totalorder %s10, 0
    %p119 = por %p117, %p118
    %p120 = scmp.ne.s32.totalorder %s109, %s112
    %p121 = scmp.eq.s32.totalorder %s15, 1
    %p122 = por %p120, %p121
    %p123 = scmp.ne.s32.totalorder %s112, %s113
    %p124 = scmp.eq.s32.totalorder %s15, 0
    %p125 = por %p123, %p124
    %p126 = scmp.ne.s32.totalorder %s112, %s113
    %p127 = scmp.eq.s32.totalorder %s16, 1
    %p128 = por %p126, %p127
    %p130 = scmp.ne.s32.totalorder %s113, %s129
    %p131 = scmp.eq.s32.totalorder %s16, 0
    %p132 = por %p130, %p131
    %p133 = scmp.le.s32.totalorder 1, %s10
    %p134 = scmp.lt.s32.totalorder %s10, 3
    %p135 = pnand %p133, %p134
    %p136 = pneg %p135
    // Predicated region
    $region9: #{encoder_forward.7} parent=5 // pred_check
      _
    $region10: #{encoder_forward.7} parent=5 // pred_check_branch
      %138 = sbr.rel (%p135) target = $region12
    $region11: #{encoder_forward.7} parent=5 // pred_region
      %s139 = ssub.s32 %s10, 1
      // Predicated region
      $region13: #{encoder_forward.7} parent=11 // pred_check
        %p140 = pneg %p57
      $region14: #{encoder_forward.7} parent=11 // pred_check_branch
        %142 = sbr.rel (%p140) target = $region16
      $region15: #{encoder_forward.7} parent=11 // pred_region
        _
      $region16: #{encoder_forward.7} parent=11 // pred_fallthru
        _
      // Predicated region
      $region17: #{encoder_forward.7} parent=11 // pred_check
        %p143 = pneg %p78
      $region18: #{encoder_forward.7} parent=11 // pred_check_branch
        %145 = sbr.rel (%p143) target = $region20
      $region19: #{encoder_forward.7} parent=11 // pred_region
        _
      $region20: #{encoder_forward.7} parent=11 // pred_fallthru
        _
      // Predicated region
      $region21: #{encoder_forward.7} parent=11 // pred_check
        %p146 = pneg %p99
      $region22: #{encoder_forward.7} parent=11 // pred_check_branch
        %148 = sbr.rel (%p146) target = $region24
      $region23: #{encoder_forward.7} parent=11 // pred_region
        _
      $region24: #{encoder_forward.7} parent=11 // pred_fallthru
        _
    $region12: #{encoder_forward.7} parent=5 // pred_fallthru
      _
    %p149 = scmp.lt.s32.totalorder %s10, 2
    // Predicated region
    $region25: #{encoder_forward.7} parent=5 // pred_check
      %p150 = pneg %p149
    $region26: #{encoder_forward.7} parent=5 // pred_check_branch
      %152 = sbr.rel (%p150) target = $region28
    $region27: #{encoder_forward.7} parent=5 // pred_region
      // Predicated region
      $region29: #{encoder_forward.7} parent=27 // pred_check
        %p153 = pneg %p30
      $region30: #{encoder_forward.7} parent=27 // pred_check_branch
        %155 = sbr.rel (%p153) target = $region32
      $region31: #{encoder_forward.7} parent=27 // pred_region
        %p156 = scmp.lt.s32.totalorder %s10, 1
        %s157 = scalar_select %p156, %s10, 1
        %s158 = smul.addr %s157, 8
        %s159 = scalar_lea.vmem %s0, %s158
      $region32: #{encoder_forward.7} parent=27 // pred_fallthru
        _
    $region28: #{encoder_forward.7} parent=5 // pred_fallthru
      _
    %p160 = scmp.le.s32.totalorder 1, %s10
    %p161 = scmp.lt.s32.totalorder %s10, 3
    %p162 = pnand %p160, %p161
    %p163 = pneg %p162
    // Predicated region
    $region33: #{encoder_forward.7} parent=5 // pred_check
      _
    $region34: #{encoder_forward.7} parent=5 // pred_check_branch
      %165 = sbr.rel (%p162) target = $region36
    $region35: #{encoder_forward.7} parent=5 // pred_region
      %s166 = ssub.s32 %s10, 1
      %p167 = scmp.lt.s32.totalorder %s15, 1
      %s168 = scalar_select %p167, %s15, 1
      %s169 = smul.addr %s168, 8
      %s170 = scalar_lea.vmem %s0, %s169
      %p171 = pneg %p36
      %p172 = pneg %p33
      %p173 = pneg %p57
      %p174 = pneg %p54
      %p175 = pneg %p78
      %p176 = pneg %p75
      %p177 = pneg %p99
      %p178 = pneg %p96
      %p179 = pneg %p125
      %p180 = pneg %p122
      %p181 = scmp.lt.s32.totalorder %s15, 1
      %s182 = scalar_select %p181, %s15, 1
      %s183 = smul.addr %s182, 8
      %s184 = scalar_lea.vmem %s4, %s183
      %p185 = scmp.lt.s32.totalorder %s15, 1
      %s186 = scalar_select %p185, %s15, 1
      %s187 = smul.addr %s186, 8
      %s188 = scalar_lea.vmem %s0, %s187
      %p189 = scmp.lt.s32.totalorder %s15, 1
      %s190 = scalar_select %p189, %s15, 1
      %s191 = smul.addr %s190, 8
      %s192 = scalar_lea.vmem %s4, %s191
      %v194 = vld [vmem:[%s188] sm:$0x1f]
      %v195 = vld [vmem:[%s1] sm:$0x1]
      %v196 = vld [vmem:[%s2] sm:$0x1]
      %vm197 = vcmask 258048
      %v198 = vsel %vm197, %v194, 0.0
      %199 = vadd.xlane.f32.xlu0 %v198
      %v200 = vpop.xlane.xlu0 %199
      %v201 = vrcp.pop 32.0
      %v202 = vmul.f32 %v200, %v201
      %v203 = vsub.f32 %v194, %v202
      %v204 = vmul.f32 %v203, %v203
      %v205 = vsel %vm197, %v204, 0.0
      %206 = vadd.xlane.f32.xlu0 %v205
      %v207 = vpop.xlane.xlu0 %206
      %v208 = vmul.f32 %v207, %v201
      %v209 = vadd.f32 %v208, 1e-05
      %v210 = vrsqrt.pop %v209
      %v211 = vmul.f32 %v203, %v210
      %v213 = vlaneseq
      %v214 = vshrl.u32 %v213, 7
      %v215 = vsub.s32 0, %v214
      %v216 = vrot.slane %v195, %v215
      %v218 = vmul.f32 %v211, %v216
      %v220 = vlaneseq
      %v221 = vshrl.u32 %v220, 7
      %v222 = vsub.s32 0, %v221
      %v223 = vrot.slane %v196, %v222
      %v225 = vadd.f32 %v218, %v223
      %v226 = vpack.c.bf16 %v225, %v225
      %v227 = vld [vmem:[%s3] sm:$0xf]
      %v228 = vld [vmem:[%s3 + $0x4] sm:$0xf]
      %v229 = vld [vmem:[%s3 + $0x8] sm:$0xf]
      %v230 = vld [vmem:[%s3 + $0xc] sm:$0xf]
      %v235 = vunpack.c.l.b16 %v227
      %v236 = vunpack.c.l.b16 %v228
      %v237 = vunpack.c.l.b16 %v229
      %v238 = vunpack.c.l.b16 %v230
      %v239 = vpack.c.b16 %v236, %v235
      %v240 = vpack.c.b16 %v238, %v237
      %vm243 = vcmask 261120
      %v245 = vsel %vm243, %v226, 0
      %247 = vmatprep.subr.bf16.mxu0 0
      %248 = vmatpush1.bf16.msra.mxu0 0
      %249 = vmatprep.subr.bf16.mxu0 0
      %250 = vmatpush1.bf16.msra.mxu0 0
      %251 = vmatprep.subr.bf16.mxu0 0
      %252 = vmatpush1.bf16.msra.mxu0 0
      %253 = vmatprep.subr.bf16.mxu0 0
      %254 = vmatpush1.bf16.msra.mxu0 0
      %255 = vmatprep.subr.bf16.mxu0 0
      %256 = vmatpush1.bf16.msra.mxu0 0
      %257 = vmatprep.subr.bf16.mxu0 0
      %258 = vmatpush1.bf16.msra.mxu0 0
      %259 = vmatprep.subr.bf16.mxu0 0
      %260 = vmatpush1.bf16.msra.mxu0 %v240
      %261 = vmatprep.subr.bf16.mxu0 0
      %262 = vmatpush1.bf16.msra.mxu0 %v239
      %263 = vmatprep.subr.bf16.mxu0 0
      %264 = vmatpush2.bf16.msra.mxu0 0
      %265 = vmatprep.subr.bf16.mxu0 0
      %266 = vmatpush2.bf16.msra.mxu0 0
      %267 = vmatprep.subr.bf16.mxu0 0
      %268 = vmatpush2.bf16.msra.mxu0 0
      %269 = vmatprep.subr.bf16.mxu0 0
      %270 = vmatpush2.bf16.msra.mxu0 0
      %271 = vmatprep.subr.bf16.mxu0 0
      %272 = vmatpush2.bf16.msra.mxu0 0
      %273 = vmatprep.subr.bf16.mxu0 0
      %274 = vmatpush2.bf16.msra.mxu0 0
      %275 = vmatprep.subr.bf16.mxu0 0
      %276 = vmatpush2.bf16.msra.mxu0 0
      %277 = vmatprep.subr.bf16.mxu0 0
      %278 = vmatpush2.bf16.msra.mxu0 0
      %279 = vmatprep.mubr.bf16.mxu0 0
      %280 = vmatmul.mubr.bf16.gmra.mxu0 %v245
      %v281 = vpop.f32.mrf.mxu0
      %v282 = vadd.f32 0.0, %v281
      %v283 = vpop.f32.mrf.mxu0
      %v284 = vpop.f32.mrf.mxu0
      %v285 = vpop.f32.mrf.mxu0
      %286 = vdwg.mxu0
      %vm287 = vcmask 126976
      %288 = vst.msk [vmem:[%s192] sm:$0x1f] %vm287, %v282
      %p289 = scmp.lt.s32.totalorder %s15, 1
      %s290 = scalar_select %p289, %s15, 1
      %s291 = smul.addr %s290, 8
      %s292 = scalar_lea.vmem %s4, %s291
      // Predicated region
      $region37: #{encoder_forward.7} parent=35 // pred_check
        %p293 = pneg %p122
      $region38: #{encoder_forward.7} parent=35 // pred_check_branch
        %295 = sbr.rel (%p293) target = $region40
      $region39: #{encoder_forward.7} parent=35 // pred_region
        _
      $region40: #{encoder_forward.7} parent=35 // pred_fallthru
        _
    $region36: #{encoder_forward.7} parent=5 // pred_fallthru
      _
    %p296 = scmp.le.s32.totalorder 2, %s10
    // Predicated region
    $region41: #{encoder_forward.7} parent=5 // pred_check
      %p297 = pneg %p296
    $region42: #{encoder_forward.7} parent=5 // pred_check_branch
      %299 = sbr.rel (%p297) target = $region44
    $region43: #{encoder_forward.7} parent=5 // pred_region
      %s300 = ssub.s32 %s10, 2
      // Predicated region
      $region45: #{encoder_forward.7} parent=43 // pred_check
        %p301 = pneg %p128
      $region46: #{encoder_forward.7} parent=43 // pred_check_branch
        %303 = sbr.rel (%p301) target = $region48
      $region47: #{encoder_forward.7} parent=43 // pred_region
        %p304 = scmp.lt.s32.totalorder %s16, 1
        %s305 = scalar_select %p304, %s16, 1
        %s306 = smul.addr %s305, 8
        %s307 = scalar_lea.vmem %s4, %s306
      $region48: #{encoder_forward.7} parent=43 // pred_fallthru
        _
    $region44: #{encoder_forward.7} parent=5 // pred_fallthru
      _
  $region6: #{encoder_forward.7} parent=0 // loop_footer
    %s14 = sadd.s32 1, %s10
  $region7: #{encoder_forward.7} parent=0 // loop_footer_branch
    %9 = sbr.rel target = $region3
  $region8: #{encoder_forward.7} parent=0 // loop_exit
    _

// kernel: encoder_forward.4
$region0: #{encoder_forward.4}
  #allocation0 [shape = 'u32[]', space=smem, size = 0x4, offset = 0x4, fixed_abs, tag = 'smem constant byte address 0x4 - core index']
  #allocation1 [shape = 'u32[144,128]{1,0:T(1,128)}', space=vmem, size = 0x12000, scoped, tag = 'internal scratch']
  %s0 = inlined_call_operand.vmem [shape: bf16[2,4,192], index: 0, kind: input, shape index: {}]
  %s1 = inlined_call_operand.vmem [shape: bf16[192,32], index: 1, kind: input, shape index: {}]
  %s2 = inlined_call_operand.vmem [shape: f32[5,32], index: 2, kind: input, shape index: {}]
  %s3 = inlined_call_operand.vmem [shape: f32[1,32], index: 3, kind: input, shape index: {}]
  %s4 = inlined_call_operand.vmem [shape: f32[1,32], index: 4, kind: input, shape index: {}]
  %s5 = inlined_call_operand.vmem [shape: f32[2,5,32], index: 5, kind: output, shape index: {}]
  %s6 = sld [smem:[#allocation0]]
  $region53: #{encoder_forward.4} parent=0
    _
  %s8 = ssub.s32 1, %s6
  %s9 = scalar_select 0, %s8, %s6
  loop: start=0, step=1, limit=4
  $region2: #{encoder_forward.4} parent=0 // loop_pre_header
    _
  $region3: #{encoder_forward.4} parent=0 // loop_header
    %s11 = sphi 0, %s15
    %p12 = scmp.ge.s32.totalorder %s11, 4
    %s21 = sphi 0, %s23
    %s24 = sphi 0, %s21
    %s25 = sphi 0, %s24
    %s41 = sphi 0, %s25
    %s45 = sphi 0, %s45
    %s47 = sphi 0, %s45
    %s48 = sphi 0, %s47
    %s62 = sphi 0, %s48
    %s66 = sphi 0, %s66
    %s68 = sphi 0, %s66
    %s69 = sphi 0, %s68
    %s83 = sphi 0, %s69
    %s87 = sphi 0, %s87
    %s89 = sphi 0, %s87
    %s90 = sphi 0, %s89
    %s104 = sphi 0, %s90
    %s108 = sphi 0, %s108
    %s110 = sphi 0, %s108
    %s111 = sphi 0, %s110
    %s125 = sphi 0, %s111
    %s131 = sphi 0, %s133
    %s134 = sphi 0, %s131
    %s135 = sphi 0, %s134
    %s151 = sphi 0, %s135
  $region4: #{encoder_forward.4} parent=0 // loop_header_branch
    %14 = sbr.rel (%p12) target = $region8
  $region5: #{encoder_forward.4} parent=0 // loop_body
    %s16 = ssub.s32 %s11, 1
    %s17 = ssub.s32 %s11, 2
    %s18 = sadd.s32 %s11, 1
    %s19 = ssub.s32 %s11, %s18
    %p20 = scmp.eq.s32.totalorder %s19, 0
    %s22 = sadd.s32 %s21, 1
    %s23 = scalar_select %p20, %s21, %s22
    %p26 = pneg %p20
    %p27 = scmp.eq.s32.totalorder %s11, 1
    %p28 = por %p26, %p27
    %p29 = scmp.ne.s32.totalorder %s21, %s24
    %p30 = scmp.eq.s32.totalorder %s11, 0
    %p31 = por %p29, %p30
    %p32 = scmp.ne.s32.totalorder %s21, %s24
    %p33 = scmp.eq.s32.totalorder %s16, 1
    %p34 = por %p32, %p33
    %p35 = scmp.ne.s32.totalorder %s24, %s25
    %p36 = scmp.eq.s32.totalorder %s16, 0
    %p37 = por %p35, %p36
    %p38 = scmp.ne.s32.totalorder %s24, %s25
    %p39 = scmp.eq.s32.totalorder %s17, 1
    %p40 = por %p38, %p39
    %p42 = scmp.ne.s32.totalorder %s25, %s41
    %p43 = scmp.eq.s32.totalorder %s17, 0
    %p44 = por %p42, %p43
    %s46 = sadd.s32 %s45, 1
    %p49 = scmp.eq.s32.totalorder %s11, 1
    %p50 = scmp.ne.s32.totalorder %s45, %s47
    %p51 = scmp.eq.s32.totalorder %s11, 0
    %p52 = por %p50, %p51
    %p53 = scmp.ne.s32.totalorder %s45, %s47
    %p54 = scmp.eq.s32.totalorder %s16, 1
    %p55 = por %p53, %p54
    %p56 = scmp.ne.s32.totalorder %s47, %s48
    %p57 = scmp.eq.s32.totalorder %s16, 0
    %p58 = por %p56, %p57
    %p59 = scmp.ne.s32.totalorder %s47, %s48
    %p60 = scmp.eq.s32.totalorder %s17, 1
    %p61 = por %p59, %p60
    %p63 = scmp.ne.s32.totalorder %s48, %s62
    %p64 = scmp.eq.s32.totalorder %s17, 0
    %p65 = por %p63, %p64
    %s67 = sadd.s32 %s66, 1
    %p70 = scmp.eq.s32.totalorder %s11, 1
    %p71 = scmp.ne.s32.totalorder %s66, %s68
    %p72 = scmp.eq.s32.totalorder %s11, 0
    %p73 = por %p71, %p72
    %p74 = scmp.ne.s32.totalorder %s66, %s68
    %p75 = scmp.eq.s32.totalorder %s16, 1
    %p76 = por %p74, %p75
    %p77 = scmp.ne.s32.totalorder %s68, %s69
    %p78 = scmp.eq.s32.totalorder %s16, 0
    %p79 = por %p77, %p78
    %p80 = scmp.ne.s32.totalorder %s68, %s69
    %p81 = scmp.eq.s32.totalorder %s17, 1
    %p82 = por %p80, %p81
    %p84 = scmp.ne.s32.totalorder %s69, %s83
    %p85 = scmp.eq.s32.totalorder %s17, 0
    %p86 = por %p84, %p85
    %s88 = sadd.s32 %s87, 1
    %p91 = scmp.eq.s32.totalorder %s11, 1
    %p92 = scmp.ne.s32.totalorder %s87, %s89
    %p93 = scmp.eq.s32.totalorder %s11, 0
    %p94 = por %p92, %p93
    %p95 = scmp.ne.s32.totalorder %s87, %s89
    %p96 = scmp.eq.s32.totalorder %s16, 1
    %p97 = por %p95, %p96
    %p98 = scmp.ne.s32.totalorder %s89, %s90
    %p99 = scmp.eq.s32.totalorder %s16, 0
    %p100 = por %p98, %p99
    %p101 = scmp.ne.s32.totalorder %s89, %s90
    %p102 = scmp.eq.s32.totalorder %s17, 1
    %p103 = por %p101, %p102
    %p105 = scmp.ne.s32.totalorder %s90, %s104
    %p106 = scmp.eq.s32.totalorder %s17, 0
    %p107 = por %p105, %p106
    %s109 = sadd.s32 %s108, 1
    %p112 = scmp.eq.s32.totalorder %s11, 1
    %p113 = scmp.ne.s32.totalorder %s108, %s110
    %p114 = scmp.eq.s32.totalorder %s11, 0
    %p115 = por %p113, %p114
    %p116 = scmp.ne.s32.totalorder %s108, %s110
    %p117 = scmp.eq.s32.totalorder %s16, 1
    %p118 = por %p116, %p117
    %p119 = scmp.ne.s32.totalorder %s110, %s111
    %p120 = scmp.eq.s32.totalorder %s16, 0
    %p121 = por %p119, %p120
    %p122 = scmp.ne.s32.totalorder %s110, %s111
    %p123 = scmp.eq.s32.totalorder %s17, 1
    %p124 = por %p122, %p123
    %p126 = scmp.ne.s32.totalorder %s111, %s125
    %p127 = scmp.eq.s32.totalorder %s17, 0
    %p128 = por %p126, %p127
    %s129 = ssub.s32 %s11, %s18
    %p130 = scmp.eq.s32.totalorder %s129, 0
    %s132 = sadd.s32 %s131, 1
    %s133 = scalar_select %p130, %s131, %s132
    %p136 = pneg %p130
    %p137 = scmp.eq.s32.totalorder %s11, 1
    %p138 = por %p136, %p137
    %p139 = scmp.ne.s32.totalorder %s131, %s134
    %p140 = scmp.eq.s32.totalorder %s11, 0
    %p141 = por %p139, %p140
    %p142 = scmp.ne.s32.totalorder %s131, %s134
    %p143 = scmp.eq.s32.totalorder %s16, 1
    %p144 = por %p142, %p143
    %p145 = scmp.ne.s32.totalorder %s134, %s135
    %p146 = scmp.eq.s32.totalorder %s16, 0
    %p147 = por %p145, %p146
    %p148 = scmp.ne.s32.totalorder %s134, %s135
    %p149 = scmp.eq.s32.totalorder %s17, 1
    %p150 = por %p148, %p149
    %p152 = scmp.ne.s32.totalorder %s135, %s151
    %p153 = scmp.eq.s32.totalorder %s17, 0
    %p154 = por %p152, %p153
    %p155 = scmp.le.s32.totalorder 1, %s11
    %p156 = scmp.lt.s32.totalorder %s11, 3
    %p157 = pnand %p155, %p156
    %p158 = pneg %p157
    // Predicated region
    $region9: #{encoder_forward.4} parent=5 // pred_check
      _
    $region10: #{encoder_forward.4} parent=5 // pred_check_branch
      %160 = sbr.rel (%p157) target = $region12
    $region11: #{encoder_forward.4} parent=5 // pred_region
      %s161 = ssub.s32 %s11, 1
      // Predicated region
      $region13: #{encoder_forward.4} parent=11 // pred_check
        %p162 = pneg %p58
      $region14: #{encoder_forward.4} parent=11 // pred_check_branch
        %164 = sbr.rel (%p162) target = $region16
      $region15: #{encoder_forward.4} parent=11 // pred_region
        _
      $region16: #{encoder_forward.4} parent=11 // pred_fallthru
        _
      // Predicated region
      $region17: #{encoder_forward.4} parent=11 // pred_check
        %p165 = pneg %p79
      $region18: #{encoder_forward.4} parent=11 // pred_check_branch
        %167 = sbr.rel (%p165) target = $region20
      $region19: #{encoder_forward.4} parent=11 // pred_region
        _
      $region20: #{encoder_forward.4} parent=11 // pred_fallthru
        _
      // Predicated region
      $region21: #{encoder_forward.4} parent=11 // pred_check
        %p168 = pneg %p100
      $region22: #{encoder_forward.4} parent=11 // pred_check_branch
        %170 = sbr.rel (%p168) target = $region24
      $region23: #{encoder_forward.4} parent=11 // pred_region
        _
      $region24: #{encoder_forward.4} parent=11 // pred_fallthru
        _
      // Predicated region
      $region25: #{encoder_forward.4} parent=11 // pred_check
        %p171 = pneg %p121
      $region26: #{encoder_forward.4} parent=11 // pred_check_branch
        %173 = sbr.rel (%p171) target = $region28
      $region27: #{encoder_forward.4} parent=11 // pred_region
        _
      $region28: #{encoder_forward.4} parent=11 // pred_fallthru
        _
    $region12: #{encoder_forward.4} parent=5 // pred_fallthru
      _
    %p174 = scmp.lt.s32.totalorder %s11, 2
    // Predicated region
    $region29: #{encoder_forward.4} parent=5 // pred_check
      %p175 = pneg %p174
    $region30: #{encoder_forward.4} parent=5 // pred_check_branch
      %177 = sbr.rel (%p175) target = $region32
    $region31: #{encoder_forward.4} parent=5 // pred_region
      // Predicated region
      $region33: #{encoder_forward.4} parent=31 // pred_check
        %p178 = pneg %p31
      $region34: #{encoder_forward.4} parent=31 // pred_check_branch
        %180 = sbr.rel (%p178) target = $region36
      $region35: #{encoder_forward.4} parent=31 // pred_region
        %p181 = scmp.lt.s32.totalorder %s11, 1
        %s182 = scalar_select %p181, %s11, 1
        %s183 = smul.addr %s182, 2
        %s184 = smul.addr %s183, 2
        %s185 = scalar_lea.vmem %s0, %s184
      $region36: #{encoder_forward.4} parent=31 // pred_fallthru
        _
    $region32: #{encoder_forward.4} parent=5 // pred_fallthru
      _
    %p186 = scmp.le.s32.totalorder 1, %s11
    %p187 = scmp.lt.s32.totalorder %s11, 3
    %p188 = pnand %p186, %p187
    %p189 = pneg %p188
    // Predicated region
    $region37: #{encoder_forward.4} parent=5 // pred_check
      _
    $region38: #{encoder_forward.4} parent=5 // pred_check_branch
      %191 = sbr.rel (%p188) target = $region40
    $region39: #{encoder_forward.4} parent=5 // pred_region
      %s192 = ssub.s32 %s11, 1
      %p193 = scmp.lt.s32.totalorder %s16, 1
      %s194 = scalar_select %p193, %s16, 1
      %s195 = smul.addr %s194, 2
      %s196 = smul.addr %s195, 2
      %s197 = scalar_lea.vmem %s0, %s196
      %p198 = pneg %p37
      %p199 = pneg %p34
      %p200 = pneg %p58
      %p201 = pneg %p55
      %p202 = pneg %p79
      %p203 = pneg %p76
      %p204 = pneg %p100
      %p205 = pneg %p97
      %p206 = pneg %p121
      %p207 = pneg %p118
      %p208 = pneg %p147
      %p209 = pneg %p144
      %p210 = scmp.lt.s32.totalorder %s16, 1
      %s211 = scalar_select %p210, %s16, 1
      %s212 = smul.addr %s211, 8
      %s213 = scalar_lea.vmem %s5, %s212
      %p214 = scmp.lt.s32.totalorder %s16, 1
      %s215 = scalar_select %p214, %s16, 1
      %s216 = smul.addr %s215, 2
      %s217 = smul.addr %s216, 2
      %s218 = scalar_lea.vmem %s0, %s217
      %p219 = scmp.lt.s32.totalorder %s16, 1
      %s220 = scalar_select %p219, %s16, 1
      %s221 = smul.addr %s220, 8
      %s222 = scalar_lea.vmem %s5, %s221
      %v224 = vld [vmem:[%s218] sm:$0xf]
      %v225 = vld [vmem:[%s1] sm:$0xf]
      %v226 = vld [vmem:[%s1 + $0x4] sm:$0xf]
      %v227 = vld [vmem:[%s1 + $0x8] sm:$0xf]
      %v228 = vld [vmem:[%s1 + $0xc] sm:$0xf]
      %v229 = vld [vmem:[%s1 + $0x10] sm:$0xf]
      %v230 = vld [vmem:[%s1 + $0x14] sm:$0xf]
      %v231 = vld [vmem:[%s1 + $0x18] sm:$0xf]
      %v232 = vld [vmem:[%s1 + $0x1c] sm:$0xf]
      %v233 = vld [vmem:[%s1 + $0x20] sm:$0xf]
      %v234 = vld [vmem:[%s1 + $0x24] sm:$0xf]
      %v235 = vld [vmem:[%s1 + $0x28] sm:$0xf]
      %v236 = vld [vmem:[%s1 + $0x2c] sm:$0xf]
      %v237 = vld [vmem:[%s1 + $0x30] sm:$0xf]
      %v238 = vld [vmem:[%s1 + $0x34] sm:$0xf]
      %v239 = vld [vmem:[%s1 + $0x38] sm:$0xf]
      %v240 = vld [vmem:[%s1 + $0x3c] sm:$0xf]
      %v241 = vld [vmem:[%s1 + $0x40] sm:$0xf]
      %v242 = vld [vmem:[%s1 + $0x44] sm:$0xf]
      %v243 = vld [vmem:[%s1 + $0x48] sm:$0xf]
      %v244 = vld [vmem:[%s1 + $0x4c] sm:$0xf]
      %v245 = vld [vmem:[%s1 + $0x50] sm:$0xf]
      %v246 = vld [vmem:[%s1 + $0x54] sm:$0xf]
      %v247 = vld [vmem:[%s1 + $0x58] sm:$0xf]
      %v248 = vld [vmem:[%s1 + $0x5c] sm:$0xf]
      %v251 = vunpack.c.l.s4 1983009808
      %v252 = vunpack.c.0.s8 %v251
      %v253 = vlaneseq
      %v254 = vshrl.u32 %v253, 7
      %v255 = vsub.s32 %v252, %v254
      %v256 = vrot.slane %v224, %v255
      %v257 = vcombine.high %v256, %v256
      %v283 = vunpack.c.l.b16 %v225
      %v284 = vunpack.c.l.b16 %v226
      %v285 = vunpack.c.l.b16 %v227
      %v286 = vunpack.c.l.b16 %v228
      %v287 = vunpack.c.l.b16 %v229
      %v288 = vunpack.c.l.b16 %v230
      %v289 = vunpack.c.l.b16 %v231
      %v290 = vunpack.c.l.b16 %v232
      %v291 = vunpack.c.l.b16 %v233
      %v292 = vunpack.c.l.b16 %v234
      %v293 = vunpack.c.l.b16 %v235
      %v294 = vunpack.c.l.b16 %v236
      %v295 = vunpack.c.l.b16 %v237
      %v296 = vunpack.c.l.b16 %v238
      %v297 = vunpack.c.l.b16 %v239
      %v298 = vunpack.c.l.b16 %v240
      %v299 = vunpack.c.l.b16 %v241
      %v300 = vunpack.c.l.b16 %v242
      %v301 = vunpack.c.l.b16 %v243
      %v302 = vunpack.c.l.b16 %v244
      %v303 = vunpack.c.l.b16 %v245
      %v304 = vunpack.c.l.b16 %v246
      %v305 = vunpack.c.l.b16 %v247
      %v306 = vunpack.c.l.b16 %v248
      %v307 = vpack.c.b16 %v284, %v283
      %v308 = vpack.c.b16 %v286, %v285
      %v309 = vpack.c.b16 %v288, %v287
      %v310 = vpack.c.b16 %v290, %v289
      %v311 = vpack.c.b16 %v292, %v291
      %v312 = vpack.c.b16 %v294, %v293
      %v313 = vpack.c.b16 %v296, %v295
      %v314 = vpack.c.b16 %v298, %v297
      %v315 = vpack.c.b16 %v300, %v299
      %v316 = vpack.c.b16 %v302, %v301
      %v317 = vpack.c.b16 %v304, %v303
      %v318 = vpack.c.b16 %v306, %v305
      %vm331 = vcmask 523264
      %v333 = vsel %vm331, %v257, 0
      %335 = vmatprep.subr.bf16.mxu0 0
      %336 = vmatpush1.bf16.msra.mxu0 %v314
      %337 = vmatprep.subr.bf16.mxu0 0
      %338 = vmatpush1.bf16.msra.mxu0 %v313
      %339 = vmatprep.subr.bf16.mxu0 0
      %340 = vmatpush1.bf16.msra.mxu0 %v312
      %341 = vmatprep.subr.bf16.mxu0 0
      %342 = vmatpush1.bf16.msra.mxu0 %v311
      %343 = vmatprep.subr.bf16.mxu0 0
      %344 = vmatpush1.bf16.msra.mxu0 %v310
      %345 = vmatprep.subr.bf16.mxu0 0
      %346 = vmatpush1.bf16.msra.mxu0 %v309
      %347 = vmatprep.subr.bf16.mxu0 0
      %348 = vmatpush1.bf16.msra.mxu0 %v308
      %349 = vmatprep.subr.bf16.mxu0 0
      %350 = vmatpush1.bf16.msra.mxu0 %v307
      %351 = vmatprep.subr.bf16.mxu0 0
      %352 = vmatpush2.bf16.msra.mxu0 0
      %353 = vmatprep.subr.bf16.mxu0 0
      %354 = vmatpush2.bf16.msra.mxu0 0
      %355 = vmatprep.subr.bf16.mxu0 0
      %356 = vmatpush2.bf16.msra.mxu0 0
      %357 = vmatprep.subr.bf16.mxu0 0
      %358 = vmatpush2.bf16.msra.mxu0 0
      %359 = vmatprep.subr.bf16.mxu0 0
      %360 = vmatpush2.bf16.msra.mxu0 %v318
      %361 = vmatprep.subr.bf16.mxu0 0
      %362 = vmatpush2.bf16.msra.mxu0 %v317
      %363 = vmatprep.subr.bf16.mxu0 0
      %364 = vmatpush2.bf16.msra.mxu0 %v316
      %365 = vmatprep.subr.bf16.mxu0 0
      %366 = vmatpush2.bf16.msra.mxu0 %v315
      %367 = vmatprep.mubr.bf16.mxu0 %v333
      %368 = vmatmul.mubr.bf16.gmra.mxu0 %v256
      %v369 = vpop.f32.mrf.mxu0
      %v370 = vadd.f32 0.0, %v369
      %v371 = vpop.f32.mrf.mxu0
      %v372 = vpop.f32.mrf.mxu0
      %v373 = vpop.f32.mrf.mxu0
      %374 = vdwg.mxu0
      %v376 = vrot.slane %v370, 7
      %vm378 = vcmask 1040384
      %v379 = vsel %vm378, 0.0, %v376
      %v380 = vld [vmem:[%s2] sm:$0x1f]
      %v381 = vadd.f32 %v379, %v380
      %v382 = vld [vmem:[%s3] sm:$0x1]
      %v383 = vld [vmem:[%s4] sm:$0x1]
      %vm384 = vcmask 258048
      %v385 = vsel %vm384, %v381, 0.0
      %386 = vadd.xlane.f32.xlu0 %v385
      %v387 = vpop.xlane.xlu0 %386
      %v388 = vrcp.pop 32.0
      %v389 = vmul.f32 %v387, %v388
      %v390 = vsub.f32 %v381, %v389
      %v391 = vmul.f32 %v390, %v390
      %v392 = vsel %vm384, %v391, 0.0
      %393 = vadd.xlane.f32.xlu0 %v392
      %v394 = vpop.xlane.xlu0 %393
      %v395 = vmul.f32 %v394, %v388
      %v396 = vadd.f32 %v395, 1e-05
      %v397 = vrsqrt.pop %v396
      %v398 = vmul.f32 %v390, %v397
      %v400 = vlaneseq
      %v401 = vshrl.u32 %v400, 7
      %v402 = vsub.s32 0, %v401
      %v403 = vrot.slane %v382, %v402
      %v405 = vmul.f32 %v398, %v403
      %v407 = vlaneseq
      %v408 = vshrl.u32 %v407, 7
      %v409 = vsub.s32 0, %v408
      %v410 = vrot.slane %v383, %v409
      %v412 = vadd.f32 %v405, %v410
      %413 = vst.msk [vmem:[%s222] sm:$0x1f] %vm384, %v412
      %p414 = scmp.lt.s32.totalorder %s16, 1
      %s415 = scalar_select %p414, %s16, 1
      %s416 = smul.addr %s415, 8
      %s417 = scalar_lea.vmem %s5, %s416
      // Predicated region
      $region41: #{encoder_forward.4} parent=39 // pred_check
        %p418 = pneg %p144
      $region42: #{encoder_forward.4} parent=39 // pred_check_branch
        %420 = sbr.rel (%p418) target = $region44
      $region43: #{encoder_forward.4} parent=39 // pred_region
        _
      $region44: #{encoder_forward.4} parent=39 // pred_fallthru
        _
    $region40: #{encoder_forward.4} parent=5 // pred_fallthru
      _
    %p421 = scmp.le.s32.totalorder 2, %s11
    // Predicated region
    $region45: #{encoder_forward.4} parent=5 // pred_check
      %p422 = pneg %p421
    $region46: #{encoder_forward.4} parent=5 // pred_check_branch
      %424 = sbr.rel (%p422) target = $region48
    $region47: #{encoder_forward.4} parent=5 // pred_region
      %s425 = ssub.s32 %s11, 2
      // Predicated region
      $region49: #{encoder_forward.4} parent=47 // pred_check
        %p426 = pneg %p150
      $region50: #{encoder_forward.4} parent=47 // pred_check_branch
        %428 = sbr.rel (%p426) target = $region52
      $region51: #{encoder_forward.4} parent=47 // pred_region
        %p429 = scmp.lt.s32.totalorder %s17, 1
        %s430 = scalar_select %p429, %s17, 1
        %s431 = smul.addr %s430, 8
        %s432 = scalar_lea.vmem %s5, %s431
      $region52: #{encoder_forward.4} parent=47 // pred_fallthru
        _
    $region48: #{encoder_forward.4} parent=5 // pred_fallthru
      _
  $region6: #{encoder_forward.4} parent=0 // loop_footer
    %s15 = sadd.s32 1, %s11
  $region7: #{encoder_forward.4} parent=0 // loop_footer_branch
    %10 = sbr.rel target = $region3
  $region8: #{encoder_forward.4} parent=0 // loop_exit
    _

// kernel: encoder_forward.5
$region0: #{encoder_forward.5}
  #allocation0 [shape = 'u32[]', space=smem, size = 0x4, offset = 0x4, fixed_abs, tag = 'smem constant byte address 0x4 - core index']
  #allocation1 [shape = 'u32[144,128]{1,0:T(1,128)}', space=vmem, size = 0x12000, scoped, tag = 'internal scratch']
  %s0 = inlined_call_operand.vmem [shape: f32[2,5,32], index: 0, kind: input, shape index: {}]
  %s1 = inlined_call_operand.vmem [shape: f32[1,32], index: 1, kind: input, shape index: {}]
  %s2 = inlined_call_operand.vmem [shape: f32[1,32], index: 2, kind: input, shape index: {}]
  %s3 = inlined_call_operand.vmem [shape: bf16[32,96], index: 3, kind: input, shape index: {}]
  %s4 = inlined_call_operand.vmem [shape: f32[1,96], index: 4, kind: input, shape index: {}]
  %s5 = inlined_call_operand.vmem [shape: bf16[32,32], index: 5, kind: input, shape index: {}]
  %s6 = inlined_call_operand.vmem [shape: f32[1,32], index: 6, kind: input, shape index: {}]
  %s7 = inlined_call_operand.vmem [shape: f32[1,32], index: 7, kind: input, shape index: {}]
  %s8 = inlined_call_operand.vmem [shape: f32[1,32], index: 8, kind: input, shape index: {}]
  %s9 = inlined_call_operand.vmem [shape: bf16[32,128], index: 9, kind: input, shape index: {}]
  %s10 = inlined_call_operand.vmem [shape: f32[1,128], index: 10, kind: input, shape index: {}]
  %s11 = inlined_call_operand.vmem [shape: bf16[128,32], index: 11, kind: input, shape index: {}]
  %s12 = inlined_call_operand.vmem [shape: f32[1,32], index: 12, kind: input, shape index: {}]
  %s13 = inlined_call_operand.vmem [shape: f32[2,5,32], index: 13, kind: output, shape index: {}]
  %s14 = sld [smem:[#allocation0]]
  $region85: #{encoder_forward.5} parent=0
    _
  %s16 = ssub.s32 1, %s14
  %s17 = scalar_select 0, %s16, %s14
  loop: start=0, step=1, limit=4
  $region2: #{encoder_forward.5} parent=0 // loop_pre_header
    _
  $region3: #{encoder_forward.5} parent=0 // loop_header
    %s19 = sphi 0, %s23
    %p20 = scmp.ge.s32.totalorder %s19, 4
    %s29 = sphi 0, %s31
    %s32 = sphi 0, %s29
    %s33 = sphi 0, %s32
    %s49 = sphi 0, %s33
    %s53 = sphi 0, %s53
    %s55 = sphi 0, %s53
    %s56 = sphi 0, %s55
    %s70 = sphi 0, %s56
    %s74 = sphi 0, %s74
    %s76 = sphi 0, %s74
    %s77 = sphi 0, %s76
    %s91 = sphi 0, %s77
    %s95 = sphi 0, %s95
    %s97 = sphi 0, %s95
    %s98 = sphi 0, %s97
    %s112 = sphi 0, %s98
    %s116 = sphi 0, %s116
    %s118 = sphi 0, %s116
    %s119 = sphi 0, %s118
    %s133 = sphi 0, %s119
    %s137 = sphi 0, %s137
    %s139 = sphi 0, %s137
    %s140 = sphi 0, %s139
    %s154 = sphi 0, %s140
    %s158 = sphi 0, %s158
    %s160 = sphi 0, %s158
    %s161 = sphi 0, %s160
    %s175 = sphi 0, %s161
    %s179 = sphi 0, %s179
    %s181 = sphi 0, %s179
    %s182 = sphi 0, %s181
    %s196 = sphi 0, %s182
    %s200 = sphi 0, %s200
    %s202 = sphi 0, %s200
    %s203 = sphi 0, %s202
    %s217 = sphi 0, %s203
    %s221 = sphi 0, %s221
    %s223 = sphi 0, %s221
    %s224 = sphi 0, %s223
    %s238 = sphi 0, %s224
    %s242 = sphi 0, %s242
    %s244 = sphi 0, %s242
    %s245 = sphi 0, %s244
    %s259 = sphi 0, %s245
    %s263 = sphi 0, %s263
    %s265 = sphi 0, %s263
    %s266 = sphi 0, %s265
    %s280 = sphi 0, %s266
    %s284 = sphi 0, %s284
    %s286 = sphi 0, %s284
    %s287 = sphi 0, %s286
    %s301 = sphi 0, %s287
    %s307 = sphi 0, %s309
    %s310 = sphi 0, %s307
    %s311 = sphi 0, %s310
    %s327 = sphi 0, %s311
  $region4: #{encoder_forward.5} parent=0 // loop_header_branch
    %22 = sbr.rel (%p20) target = $region8
  $region5: #{encoder_forward.5} parent=0 // loop_body
    %s24 = ssub.s32 %s19, 1
    %s25 = ssub.s32 %s19, 2
    %s26 = sadd.s32 %s19, 1
    %s27 = ssub.s32 %s19, %s26
    %p28 = scmp.eq.s32.totalorder %s27, 0
    %s30 = sadd.s32 %s29, 1
    %s31 = scalar_select %p28, %s29, %s30
    %p34 = pneg %p28
    %p35 = scmp.eq.s32.totalorder %s19, 1
    %p36 = por %p34, %p35
    %p37 = scmp.ne.s32.totalorder %s29, %s32
    %p38 = scmp.eq.s32.totalorder %s19, 0
    %p39 = por %p37, %p38
    %p40 = scmp.ne.s32.totalorder %s29, %s32
    %p41 = scmp.eq.s32.totalorder %s24, 1
    %p42 = por %p40, %p41
    %p43 = scmp.ne.s32.totalorder %s32, %s33
    %p44 = scmp.eq.s32.totalorder %s24, 0
    %p45 = por %p43, %p44
    %p46 = scmp.ne.s32.totalorder %s32, %s33
    %p47 = scmp.eq.s32.totalorder %s25, 1
    %p48 = por %p46, %p47
    %p50 = scmp.ne.s32.totalorder %s33, %s49
    %p51 = scmp.eq.s32.totalorder %s25, 0
    %p52 = por %p50, %p51
    %s54 = sadd.s32 %s53, 1
    %p57 = scmp.eq.s32.totalorder %s19, 1
    %p58 = scmp.ne.s32.totalorder %s53, %s55
    %p59 = scmp.eq.s32.totalorder %s19, 0
    %p60 = por %p58, %p59
    %p61 = scmp.ne.s32.totalorder %s53, %s55
    %p62 = scmp.eq.s32.totalorder %s24, 1
    %p63 = por %p61, %p62
    %p64 = scmp.ne.s32.totalorder %s55, %s56
    %p65 = scmp.eq.s32.totalorder %s24, 0
    %p66 = por %p64, %p65
    %p67 = scmp.ne.s32.totalorder %s55, %s56
    %p68 = scmp.eq.s32.totalorder %s25, 1
    %p69 = por %p67, %p68
    %p71 = scmp.ne.s32.totalorder %s56, %s70
    %p72 = scmp.eq.s32.totalorder %s25, 0
    %p73 = por %p71, %p72
    %s75 = sadd.s32 %s74, 1
    %p78 = scmp.eq.s32.totalorder %s19, 1
    %p79 = scmp.ne.s32.totalorder %s74, %s76
    %p80 = scmp.eq.s32.totalorder %s19, 0
    %p81 = por %p79, %p80
    %p82 = scmp.ne.s32.totalorder %s74, %s76
    %p83 = scmp.eq.s32.totalorder %s24, 1
    %p84 = por %p82, %p83
    %p85 = scmp.ne.s32.totalorder %s76, %s77
    %p86 = scmp.eq.s32.totalorder %s24, 0
    %p87 = por %p85, %p86
    %p88 = scmp.ne.s32.totalorder %s76, %s77
    %p89 = scmp.eq.s32.totalorder %s25, 1
    %p90 = por %p88, %p89
    %p92 = scmp.ne.s32.totalorder %s77, %s91
    %p93 = scmp.eq.s32.totalorder %s25, 0
    %p94 = por %p92, %p93
    %s96 = sadd.s32 %s95, 1
    %p99 = scmp.eq.s32.totalorder %s19, 1
    %p100 = scmp.ne.s32.totalorder %s95, %s97
    %p101 = scmp.eq.s32.totalorder %s19, 0
    %p102 = por %p100, %p101
    %p103 = scmp.ne.s32.totalorder %s95, %s97
    %p104 = scmp.eq.s32.totalorder %s24, 1
    %p105 = por %p103, %p104
    %p106 = scmp.ne.s32.totalorder %s97, %s98
    %p107 = scmp.eq.s32.totalorder %s24, 0
    %p108 = por %p106, %p107
    %p109 = scmp.ne.s32.totalorder %s97, %s98
    %p110 = scmp.eq.s32.totalorder %s25, 1
    %p111 = por %p109, %p110
    %p113 = scmp.ne.s32.totalorder %s98, %s112
    %p114 = scmp.eq.s32.totalorder %s25, 0
    %p115 = por %p113, %p114
    %s117 = sadd.s32 %s116, 1
    %p120 = scmp.eq.s32.totalorder %s19, 1
    %p121 = scmp.ne.s32.totalorder %s116, %s118
    %p122 = scmp.eq.s32.totalorder %s19, 0
    %p123 = por %p121, %p122
    %p124 = scmp.ne.s32.totalorder %s116, %s118
    %p125 = scmp.eq.s32.totalorder %s24, 1
    %p126 = por %p124, %p125
    %p127 = scmp.ne.s32.totalorder %s118, %s119
    %p128 = scmp.eq.s32.totalorder %s24, 0
    %p129 = por %p127, %p128
    %p130 = scmp.ne.s32.totalorder %s118, %s119
    %p131 = scmp.eq.s32.totalorder %s25, 1
    %p132 = por %p130, %p131
    %p134 = scmp.ne.s32.totalorder %s119, %s133
    %p135 = scmp.eq.s32.totalorder %s25, 0
    %p136 = por %p134, %p135
    %s138 = sadd.s32 %s137, 1
    %p141 = scmp.eq.s32.totalorder %s19, 1
    %p142 = scmp.ne.s32.totalorder %s137, %s139
    %p143 = scmp.eq.s32.totalorder %s19, 0
    %p144 = por %p142, %p143
    %p145 = scmp.ne.s32.totalorder %s137, %s139
    %p146 = scmp.eq.s32.totalorder %s24, 1
    %p147 = por %p145, %p146
    %p148 = scmp.ne.s32.totalorder %s139, %s140
    %p149 = scmp.eq.s32.totalorder %s24, 0
    %p150 = por %p148, %p149
    %p151 = scmp.ne.s32.totalorder %s139, %s140
    %p152 = scmp.eq.s32.totalorder %s25, 1
    %p153 = por %p151, %p152
    %p155 = scmp.ne.s32.totalorder %s140, %s154
    %p156 = scmp.eq.s32.totalorder %s25, 0
    %p157 = por %p155, %p156
    %s159 = sadd.s32 %s158, 1
    %p162 = scmp.eq.s32.totalorder %s19, 1
    %p163 = scmp.ne.s32.totalorder %s158, %s160
    %p164 = scmp.eq.s32.totalorder %s19, 0
    %p165 = por %p163, %p164
    %p166 = scmp.ne.s32.totalorder %s158, %s160
    %p167 = scmp.eq.s32.totalorder %s24, 1
    %p168 = por %p166, %p167
    %p169 = scmp.ne.s32.totalorder %s160, %s161
    %p170 = scmp.eq.s32.totalorder %s24, 0
    %p171 = por %p169, %p170
    %p172 = scmp.ne.s32.totalorder %s160, %s161
    %p173 = scmp.eq.s32.totalorder %s25, 1
    %p174 = por %p172, %p173
    %p176 = scmp.ne.s32.totalorder %s161, %s175
    %p177 = scmp.eq.s32.totalorder %s25, 0
    %p178 = por %p176, %p177
    %s180 = sadd.s32 %s179, 1
    %p183 = scmp.eq.s32.totalorder %s19, 1
    %p184 = scmp.ne.s32.totalorder %s179, %s181
    %p185 = scmp.eq.s32.totalorder %s19, 0
    %p186 = por %p184, %p185
    %p187 = scmp.ne.s32.totalorder %s179, %s181
    %p188 = scmp.eq.s32.totalorder %s24, 1
    %p189 = por %p187, %p188
    %p190 = scmp.ne.s32.totalorder %s181, %s182
    %p191 = scmp.eq.s32.totalorder %s24, 0
    %p192 = por %p190, %p191
    %p193 = scmp.ne.s32.totalorder %s181, %s182
    %p194 = scmp.eq.s32.totalorder %s25, 1
    %p195 = por %p193, %p194
    %p197 = scmp.ne.s32.totalorder %s182, %s196
    %p198 = scmp.eq.s32.totalorder %s25, 0
    %p199 = por %p197, %p198
    %s201 = sadd.s32 %s200, 1
    %p204 = scmp.eq.s32.totalorder %s19, 1
    %p205 = scmp.ne.s32.totalorder %s200, %s202
    %p206 = scmp.eq.s32.totalorder %s19, 0
    %p207 = por %p205, %p206
    %p208 = scmp.ne.s32.totalorder %s200, %s202
    %p209 = scmp.eq.s32.totalorder %s24, 1
    %p210 = por %p208, %p209
    %p211 = scmp.ne.s32.totalorder %s202, %s203
    %p212 = scmp.eq.s32.totalorder %s24, 0
    %p213 = por %p211, %p212
    %p214 = scmp.ne.s32.totalorder %s202, %s203
    %p215 = scmp.eq.s32.totalorder %s25, 1
    %p216 = por %p214, %p215
    %p218 = scmp.ne.s32.totalorder %s203, %s217
    %p219 = scmp.eq.s32.totalorder %s25, 0
    %p220 = por %p218, %p219
    %s222 = sadd.s32 %s221, 1
    %p225 = scmp.eq.s32.totalorder %s19, 1
    %p226 = scmp.ne.s32.totalorder %s221, %s223
    %p227 = scmp.eq.s32.totalorder %s19, 0
    %p228 = por %p226, %p227
    %p229 = scmp.ne.s32.totalorder %s221, %s223
    %p230 = scmp.eq.s32.totalorder %s24, 1
    %p231 = por %p229, %p230
    %p232 = scmp.ne.s32.totalorder %s223, %s224
    %p233 = scmp.eq.s32.totalorder %s24, 0
    %p234 = por %p232, %p233
    %p235 = scmp.ne.s32.totalorder %s223, %s224
    %p236 = scmp.eq.s32.totalorder %s25, 1
    %p237 = por %p235, %p236
    %p239 = scmp.ne.s32.totalorder %s224, %s238
    %p240 = scmp.eq.s32.totalorder %s25, 0
    %p241 = por %p239, %p240
    %s243 = sadd.s32 %s242, 1
    %p246 = scmp.eq.s32.totalorder %s19, 1
    %p247 = scmp.ne.s32.totalorder %s242, %s244
    %p248 = scmp.eq.s32.totalorder %s19, 0
    %p249 = por %p247, %p248
    %p250 = scmp.ne.s32.totalorder %s242, %s244
    %p251 = scmp.eq.s32.totalorder %s24, 1
    %p252 = por %p250, %p251
    %p253 = scmp.ne.s32.totalorder %s244, %s245
    %p254 = scmp.eq.s32.totalorder %s24, 0
    %p255 = por %p253, %p254
    %p256 = scmp.ne.s32.totalorder %s244, %s245
    %p257 = scmp.eq.s32.totalorder %s25, 1
    %p258 = por %p256, %p257
    %p260 = scmp.ne.s32.totalorder %s245, %s259
    %p261 = scmp.eq.s32.totalorder %s25, 0
    %p262 = por %p260, %p261
    %s264 = sadd.s32 %s263, 1
    %p267 = scmp.eq.s32.totalorder %s19, 1
    %p268 = scmp.ne.s32.totalorder %s263, %s265
    %p269 = scmp.eq.s32.totalorder %s19, 0
    %p270 = por %p268, %p269
    %p271 = scmp.ne.s32.totalorder %s263, %s265
    %p272 = scmp.eq.s32.totalorder %s24, 1
    %p273 = por %p271, %p272
    %p274 = scmp.ne.s32.totalorder %s265, %s266
    %p275 = scmp.eq.s32.totalorder %s24, 0
    %p276 = por %p274, %p275
    %p277 = scmp.ne.s32.totalorder %s265, %s266
    %p278 = scmp.eq.s32.totalorder %s25, 1
    %p279 = por %p277, %p278
    %p281 = scmp.ne.s32.totalorder %s266, %s280
    %p282 = scmp.eq.s32.totalorder %s25, 0
    %p283 = por %p281, %p282
    %s285 = sadd.s32 %s284, 1
    %p288 = scmp.eq.s32.totalorder %s19, 1
    %p289 = scmp.ne.s32.totalorder %s284, %s286
    %p290 = scmp.eq.s32.totalorder %s19, 0
    %p291 = por %p289, %p290
    %p292 = scmp.ne.s32.totalorder %s284, %s286
    %p293 = scmp.eq.s32.totalorder %s24, 1
    %p294 = por %p292, %p293
    %p295 = scmp.ne.s32.totalorder %s286, %s287
    %p296 = scmp.eq.s32.totalorder %s24, 0
    %p297 = por %p295, %p296
    %p298 = scmp.ne.s32.totalorder %s286, %s287
    %p299 = scmp.eq.s32.totalorder %s25, 1
    %p300 = por %p298, %p299
    %p302 = scmp.ne.s32.totalorder %s287, %s301
    %p303 = scmp.eq.s32.totalorder %s25, 0
    %p304 = por %p302, %p303
    %s305 = ssub.s32 %s19, %s26
    %p306 = scmp.eq.s32.totalorder %s305, 0
    %s308 = sadd.s32 %s307, 1
    %s309 = scalar_select %p306, %s307, %s308
    %p312 = pneg %p306
    %p313 = scmp.eq.s32.totalorder %s19, 1
    %p314 = por %p312, %p313
    %p315 = scmp.ne.s32.totalorder %s307, %s310
    %p316 = scmp.eq.s32.totalorder %s19, 0
    %p317 = por %p315, %p316
    %p318 = scmp.ne.s32.totalorder %s307, %s310
    %p319 = scmp.eq.s32.totalorder %s24, 1
    %p320 = por %p318, %p319
    %p321 = scmp.ne.s32.totalorder %s310, %s311
    %p322 = scmp.eq.s32.totalorder %s24, 0
    %p323 = por %p321, %p322
    %p324 = scmp.ne.s32.totalorder %s310, %s311
    %p325 = scmp.eq.s32.totalorder %s25, 1
    %p326 = por %p324, %p325
    %p328 = scmp.ne.s32.totalorder %s311, %s327
    %p329 = scmp.eq.s32.totalorder %s25, 0
    %p330 = por %p328, %p329
    %p331 = scmp.le.s32.totalorder 1, %s19
    %p332 = scmp.lt.s32.totalorder %s19, 3
    %p333 = pnand %p331, %p332
    %p334 = pneg %p333
    // Predicated region
    $region9: #{encoder_forward.5} parent=5 // pred_check
      _
    $region10: #{encoder_forward.5} parent=5 // pred_check_branch
      %336 = sbr.rel (%p333) target = $region12
    $region11: #{encoder_forward.5} parent=5 // pred_region
      %s337 = ssub.s32 %s19, 1
      // Predicated region
      $region13: #{encoder_forward.5} parent=11 // pred_check
        %p338 = pneg %p66
      $region14: #{encoder_forward.5} parent=11 // pred_check_branch
        %340 = sbr.rel (%p338) target = $region16
      $region15: #{encoder_forward.5} parent=11 // pred_region
        _
      $region16: #{encoder_forward.5} parent=11 // pred_fallthru
        _
      // Predicated region
      $region17: #{encoder_forward.5} parent=11 // pred_check
        %p341 = pneg %p87
      $region18: #{encoder_forward.5} parent=11 // pred_check_branch
        %343 = sbr.rel (%p341) target = $region20
      $region19: #{encoder_forward.5} parent=11 // pred_region
        _
      $region20: #{encoder_forward.5} parent=11 // pred_fallthru
        _
      // Predicated region
      $region21: #{encoder_forward.5} parent=11 // pred_check
        %p344 = pneg %p108
      $region22: #{encoder_forward.5} parent=11 // pred_check_branch
        %346 = sbr.rel (%p344) target = $region24
      $region23: #{encoder_forward.5} parent=11 // pred_region
        _
      $region24: #{encoder_forward.5} parent=11 // pred_fallthru
        _
      // Predicated region
      $region25: #{encoder_forward.5} parent=11 // pred_check
        %p347 = pneg %p129
      $region26: #{encoder_forward.5} parent=11 // pred_check_branch
        %349 = sbr.rel (%p347) target = $region28
      $region27: #{encoder_forward.5} parent=11 // pred_region
        _
      $region28: #{encoder_forward.5} parent=11 // pred_fallthru
        _
      // Predicated region
      $region29: #{encoder_forward.5} parent=11 // pred_check
        %p350 = pneg %p150
      $region30: #{encoder_forward.5} parent=11 // pred_check_branch
        %352 = sbr.rel (%p350) target = $region32
      $region31: #{encoder_forward.5} parent=11 // pred_region
        _
      $region32: #{encoder_forward.5} parent=11 // pred_fallthru
        _
      // Predicated region
      $region33: #{encoder_forward.5} parent=11 // pred_check
        %p353 = pneg %p171
      $region34: #{encoder_forward.5} parent=11 // pred_check_branch
        %355 = sbr.rel (%p353) target = $region36
      $region35: #{encoder_forward.5} parent=11 // pred_region
        _
      $region36: #{encoder_forward.5} parent=11 // pred_fallthru
        _
      // Predicated region
      $region37: #{encoder_forward.5} parent=11 // pred_check
        %p356 = pneg %p192
      $region38: #{encoder_forward.5} parent=11 // pred_check_branch
        %358 = sbr.rel (%p356) target = $region40
      $region39: #{encoder_forward.5} parent=11 // pred_region
        _
      $region40: #{encoder_forward.5} parent=11 // pred_fallthru
        _
      // Predicated region
      $region41: #{encoder_forward.5} parent=11 // pred_check
        %p359 = pneg %p213
      $region42: #{encoder_forward.5} parent=11 // pred_check_branch
        %361 = sbr.rel (%p359) target = $region44
      $region43: #{encoder_forward.5} parent=11 // pred_region
        _
      $region44: #{encoder_forward.5} parent=11 // pred_fallthru
        _
      // Predicated region
      $region45: #{encoder_forward.5} parent=11 // pred_check
        %p362 = pneg %p234
      $region46: #{encoder_forward.5} parent=11 // pred_check_branch
        %364 = sbr.rel (%p362) target = $region48
      $region47: #{encoder_forward.5} parent=11 // pred_region
        _
      $region48: #{encoder_forward.5} parent=11 // pred_fallthru
        _
      // Predicated region
      $region49: #{encoder_forward.5} parent=11 // pred_check
        %p365 = pneg %p255
      $region50: #{encoder_forward.5} parent=11 // pred_check_branch
        %367 = sbr.rel (%p365) target = $region52
      $region51: #{encoder_forward.5} parent=11 // pred_region
        _
      $region52: #{encoder_forward.5} parent=11 // pred_fallthru
        _
      // Predicated region
      $region53: #{encoder_forward.5} parent=11 // pred_check
        %p368 = pneg %p276
      $region54: #{encoder_forward.5} parent=11 // pred_check_branch
        %370 = sbr.rel (%p368) target = $region56
      $region55: #{encoder_forward.5} parent=11 // pred_region
        _
      $region56: #{encoder_forward.5} parent=11 // pred_fallthru
        _
      // Predicated region
      $region57: #{encoder_forward.5} parent=11 // pred_check
        %p371 = pneg %p297
      $region58: #{encoder_forward.5} parent=11 // pred_check_branch
        %373 = sbr.rel (%p371) target = $region60
      $region59: #{encoder_forward.5} parent=11 // pred_region
        _
      $region60: #{encoder_forward.5} parent=11 // pred_fallthru
        _
    $region12: #{encoder_forward.5} parent=5 // pred_fallthru
      _
    %p374 = scmp.lt.s32.totalorder %s19, 2
    // Predicated region
    $region61: #{encoder_forward.5} parent=5 // pred_check
      %p375 = pneg %p374
    $region62: #{encoder_forward.5} parent=5 // pred_check_branch
      %377 = sbr.rel (%p375) target = $region64
    $region63: #{encoder_forward.5} parent=5 // pred_region
      // Predicated region
      $region65: #{encoder_forward.5} parent=63 // pred_check
        %p378 = pneg %p39
      $region66: #{encoder_forward.5} parent=63 // pred_check_branch
        %380 = sbr.rel (%p378) target = $region68
      $region67: #{encoder_forward.5} parent=63 // pred_region
        %p381 = scmp.lt.s32.totalorder %s19, 1
        %s382 = scalar_select %p381, %s19, 1
        %s383 = smul.addr %s382, 8
        %s384 = scalar_lea.vmem %s0, %s383
      $region68: #{encoder_forward.5} parent=63 // pred_fallthru
        _
    $region64: #{encoder_forward.5} parent=5 // pred_fallthru
      _
    %p385 = scmp.le.s32.totalorder 1, %s19
    %p386 = scmp.lt.s32.totalorder %s19, 3
    %p387 = pnand %p385, %p386
    %p388 = pneg %p387
    // Predicated region
    $region69: #{encoder_forward.5} parent=5 // pred_check
      _
    $region70: #{encoder_forward.5} parent=5 // pred_check_branch
      %390 = sbr.rel (%p387) target = $region72
    $region71: #{encoder_forward.5} parent=5 // pred_region
      %s391 = ssub.s32 %s19, 1
      %p392 = scmp.lt.s32.totalorder %s24, 1
      %s393 = scalar_select %p392, %s24, 1
      %s394 = smul.addr %s393, 8
      %s395 = scalar_lea.vmem %s0, %s394
      %p396 = pneg %p45
      %p397 = pneg %p42
      %p398 = pneg %p66
      %p399 = pneg %p63
      %p400 = pneg %p87
      %p401 = pneg %p84
      %p402 = pneg %p108
      %p403 = pneg %p105
      %p404 = pneg %p129
      %p405 = pneg %p126
      %p406 = pneg %p150
      %p407 = pneg %p147
      %p408 = pneg %p171
      %p409 = pneg %p168
      %p410 = pneg %p192
      %p411 = pneg %p189
      %p412 = pneg %p213
      %p413 = pneg %p210
      %p414 = pneg %p234
      %p415 = pneg %p231
      %p416 = pneg %p255
      %p417 = pneg %p252
      %p418 = pneg %p276
      %p419 = pneg %p273
      %p420 = pneg %p297
      %p421 = pneg %p294
      %p422 = pneg %p323
      %p423 = pneg %p320
      %p424 = scmp.lt.s32.totalorder %s24, 1
      %s425 = scalar_select %p424, %s24, 1
      %s426 = smul.addr %s425, 8
      %s427 = scalar_lea.vmem %s13, %s426
      %p428 = scmp.lt.s32.totalorder %s24, 1
      %s429 = scalar_select %p428, %s24, 1
      %s430 = smul.addr %s429, 8
      %s431 = scalar_lea.vmem %s0, %s430
      %p432 = scmp.lt.s32.totalorder %s24, 1
      %s433 = scalar_select %p432, %s24, 1
      %s434 = smul.addr %s433, 8
      %s435 = scalar_lea.vmem %s13, %s434
      %v437 = vld [vmem:[%s431] sm:$0x1f]
      %v438 = vld [vmem:[%s1] sm:$0x1]
      %v439 = vld [vmem:[%s2] sm:$0x1]
      %vm440 = vcmask 258048
      %v441 = vsel %vm440, %v437, 0.0
      %442 = vadd.xlane.f32.xlu0 %v441
      %v443 = vpop.xlane.xlu0 %442
      %v444 = vrcp.pop 32.0
      %v445 = vmul.f32 %v443, %v444
      %v446 = vsub.f32 %v437, %v445
      %v447 = vmul.f32 %v446, %v446
      %v448 = vsel %vm440, %v447, 0.0
      %449 = vadd.xlane.f32.xlu0 %v448
      %v450 = vpop.xlane.xlu0 %449
      %v451 = vmul.f32 %v450, %v444
      %v452 = vadd.f32 %v451, 1e-05
      %v453 = vrsqrt.pop %v452
      %v454 = vmul.f32 %v446, %v453
      %v456 = vlaneseq
      %v457 = vshrl.u32 %v456, 7
      %v458 = vsub.s32 0, %v457
      %v459 = vrot.slane %v438, %v458
      %v461 = vmul.f32 %v454, %v459
      %v463 = vlaneseq
      %v464 = vshrl.u32 %v463, 7
      %v465 = vsub.s32 0, %v464
      %v466 = vrot.slane %v439, %v465
      %v468 = vadd.f32 %v461, %v466
      %v469 = vpack.c.bf16 %v468, %v468
      %v470 = vld [vmem:[%s3] sm:$0xf]
      %v471 = vld [vmem:[%s3 + $0x4] sm:$0xf]
      %v472 = vld [vmem:[%s3 + $0x8] sm:$0xf]
      %v473 = vld [vmem:[%s3 + $0xc] sm:$0xf]
      %v474 = vld [vmem:[%s4] sm:$0x1]
      %v476 = vlaneseq
      %v477 = vshrl.u32 %v476, 7
      %v478 = vsub.s32 0, %v477
      %v479 = vrot.slane %v474, %v478
      %v485 = vunpack.c.l.b16 %v470
      %v486 = vunpack.c.l.b16 %v471
      %v487 = vunpack.c.l.b16 %v472
      %v488 = vunpack.c.l.b16 %v473
      %v489 = vpack.c.b16 %v486, %v485
      %v490 = vpack.c.b16 %v488, %v487
      %vm493 = vcmask 261120
      %v495 = vsel %vm493, %v469, 0
      %497 = vmatprep.subr.bf16.mxu0 0
      %498 = vmatpush1.bf16.msra.mxu0 0
      %499 = vmatprep.subr.bf16.mxu0 0
      %500 = vmatpush1.bf16.msra.mxu0 0
      %501 = vmatprep.subr.bf16.mxu0 0
      %502 = vmatpush1.bf16.msra.mxu0 0
      %503 = vmatprep.subr.bf16.mxu0 0
      %504 = vmatpush1.bf16.msra.mxu0 0
      %505 = vmatprep.subr.bf16.mxu0 0
      %506 = vmatpush1.bf16.msra.mxu0 0
      %507 = vmatprep.subr.bf16.mxu0 0
      %508 = vmatpush1.bf16.msra.mxu0 0
      %509 = vmatprep.subr.bf16.mxu0 0
      %510 = vmatpush1.bf16.msra.mxu0 %v490
      %511 = vmatprep.subr.bf16.mxu0 0
      %512 = vmatpush1.bf16.msra.mxu0 %v489
      %513 = vmatprep.subr.bf16.mxu0 0
      %514 = vmatpush2.bf16.msra.mxu0 0
      %515 = vmatprep.subr.bf16.mxu0 0
      %516 = vmatpush2.bf16.msra.mxu0 0
      %517 = vmatprep.subr.bf16.mxu0 0
      %518 = vmatpush2.bf16.msra.mxu0 0
      %519 = vmatprep.subr.bf16.mxu0 0
      %520 = vmatpush2.bf16.msra.mxu0 0
      %521 = vmatprep.subr.bf16.mxu0 0
      %522 = vmatpush2.bf16.msra.mxu0 0
      %523 = vmatprep.subr.bf16.mxu0 0
      %524 = vmatpush2.bf16.msra.mxu0 0
      %525 = vmatprep.subr.bf16.mxu0 0
      %526 = vmatpush2.bf16.msra.mxu0 0
      %527 = vmatprep.subr.bf16.mxu0 0
      %528 = vmatpush2.bf16.msra.mxu0 0
      %529 = vmatprep.mubr.bf16.mxu0 0
      %530 = vmatmul.mubr.bf16.gmra.mxu0 %v495
      %v531 = vpop.f32.mrf.mxu0
      %v532 = vadd.f32 %v479, %v531
      %v533 = vpop.f32.mrf.mxu0
      %v534 = vpop.f32.mrf.mxu0
      %v535 = vpop.f32.mrf.mxu0
      %536 = vdwg.mxu0
      %v537 = vpack.c.bf16 %v532, %v532
      %539 = vrot.lane.b32.xlu0 %v537, 96
      %v540 = vpop.permute.xlu0 %539
      %vm541 = vcmask 64512
      %v543 = vsel %vm541, %v537, 0
      %v546 = vsel %vm541, %v540, 0
      %548 = vmatprep.subr.bf16.mxu0 0
      %549 = vmatpush1.bf16.xpose.msra.mxu0 0
      %550 = vmatprep.subr.bf16.mxu0 0
      %551 = vmatpush1.bf16.xpose.msra.mxu0 0
      %552 = vmatprep.subr.bf16.mxu0 0
      %553 = vmatpush1.bf16.xpose.msra.mxu0 0
      %554 = vmatprep.subr.bf16.mxu0 0
      %555 = vmatpush1.bf16.xpose.msra.mxu0 0
      %556 = vmatprep.subr.bf16.mxu0 0
      %557 = vmatpush1.bf16.xpose.msra.mxu0 0
      %558 = vmatprep.subr.bf16.mxu0 0
      %559 = vmatpush1.bf16.xpose.msra.mxu0 0
      %560 = vmatprep.subr.bf16.mxu0 0
      %561 = vmatpush1.bf16.xpose.msra.mxu0 0
      %562 = vmatprep.subr.bf16.mxu0 0
      %563 = vmatpush1.bf16.xpose.msra.mxu0 %v546
      %564 = vmatprep.subr.bf16.mxu0 0
      %565 = vmatpush2.bf16.xpose.msra.mxu0 0
      %566 = vmatprep.subr.bf16.mxu0 0
      %567 = vmatpush2.bf16.xpose.msra.mxu0 0
      %568 = vmatprep.subr.bf16.mxu0 0
      %569 = vmatpush2.bf16.xpose.msra.mxu0 0
      %570 = vmatprep.subr.bf16.mxu0 0
      %571 = vmatpush2.bf16.xpose.msra.mxu0 0
      %572 = vmatprep.subr.bf16.mxu0 0
      %573 = vmatpush2.bf16.xpose.msra.mxu0 0
      %574 = vmatprep.subr.bf16.mxu0 0
      %575 = vmatpush2.bf16.xpose.msra.mxu0 0
      %576 = vmatprep.subr.bf16.mxu0 0
      %577 = vmatpush2.bf16.xpose.msra.mxu0 0
      %578 = vmatprep.subr.bf16.mxu0 0
      %579 = vmatpush2.bf16.xpose.msra.mxu0 0
      %580 = vmatprep.mubr.bf16.mxu0 0
      %581 = vmatmul.mubr.bf16.gmra.mxu0 %v543
      %v582 = vpop.f32.mrf.mxu0
      %v583 = vadd.f32 0.0, %v582
      %v584 = vpop.f32.mrf.mxu0
      %v585 = vpop.f32.mrf.mxu0
      %v586 = vpop.f32.mrf.mxu0
      %587 = vdwg.mxu0
      %vm588 = vcmask 36864
      %v589 = vsel %vm588, %v583, -inf
      %590 = vmax.xlane.f32.xlu0 %v589
      %v591 = vpop.xlane.xlu0 %590
      %v592 = vsub.f32 %v583, %v591
      %v593 = vmul.f32 %v592, 1.442695
      %v594 = vpow.pop %v593
      %v595 = vsel %vm588, %v594, 0.0
      %596 = vadd.xlane.f32.xlu0 %v595
      %v597 = vpop.xlane.xlu0 %596
      %v598 = vrcp.pop %v597
      %v599 = vmul.f32 %v594, %v598
      %v600 = vpack.c.bf16 %v599, %v599
      %601 = vrot.lane.b32.xlu0 %v537, 64
      %v602 = vpop.permute.xlu0 %601
      %vm603 = vcmask 39936
      %v605 = vsel %vm603, %v600, 0
      %vm607 = vcmask 1041408
      %vm608 = vcmask 1042432
      %v609 = vsel %vm607, 4294967295, 65535
      %v610 = vsel %vm608, %v609, 0
      %v612 = vand.u32 %v602, %v610
      %614 = vmatprep.subr.bf16.mxu0 0
      %615 = vmatpush1.bf16.msra.mxu0 0
      %616 = vmatprep.subr.bf16.mxu0 0
      %617 = vmatpush1.bf16.msra.mxu0 0
      %618 = vmatprep.subr.bf16.mxu0 0
      %619 = vmatpush1.bf16.msra.mxu0 0
      %620 = vmatprep.subr.bf16.mxu0 0
      %621 = vmatpush1.bf16.msra.mxu0 0
      %622 = vmatprep.subr.bf16.mxu0 0
      %623 = vmatpush1.bf16.msra.mxu0 0
      %624 = vmatprep.subr.bf16.mxu0 0
      %625 = vmatpush1.bf16.msra.mxu0 0
      %626 = vmatprep.subr.bf16.mxu0 0
      %627 = vmatpush1.bf16.msra.mxu0 0
      %628 = vmatprep.subr.bf16.mxu0 0
      %629 = vmatpush1.bf16.msra.mxu0 %v612
      %630 = vmatprep.subr.bf16.mxu0 0
      %631 = vmatpush2.bf16.msra.mxu0 0
      %632 = vmatprep.subr.bf16.mxu0 0
      %633 = vmatpush2.bf16.msra.mxu0 0
      %634 = vmatprep.subr.bf16.mxu0 0
      %635 = vmatpush2.bf16.msra.mxu0 0
      %636 = vmatprep.subr.bf16.mxu0 0
      %637 = vmatpush2.bf16.msra.mxu0 0
      %638 = vmatprep.subr.bf16.mxu0 0
      %639 = vmatpush2.bf16.msra.mxu0 0
      %640 = vmatprep.subr.bf16.mxu0 0
      %641 = vmatpush2.bf16.msra.mxu0 0
      %642 = vmatprep.subr.bf16.mxu0 0
      %643 = vmatpush2.bf16.msra.mxu0 0
      %644 = vmatprep.subr.bf16.mxu0 0
      %645 = vmatpush2.bf16.msra.mxu0 0
      %646 = vmatprep.mubr.bf16.mxu0 0
      %647 = vmatmul.mubr.bf16.gmra.mxu0 %v605
      %v648 = vpop.f32.mrf.mxu0
      %v649 = vadd.f32 0.0, %v648
      %v650 = vpop.f32.mrf.mxu0
      %v651 = vpop.f32.mrf.mxu0
      %v652 = vpop.f32.mrf.mxu0
      %653 = vdwg.mxu0
      %654 = vrot.lane.b32.xlu0 %v537, 120
      %v655 = vpop.permute.xlu0 %654
      %656 = vrot.lane.b32.xlu0 %v537, 88
      %v657 = vpop.permute.xlu0 %656
      %v659 = vsel %vm541, %v655, 0
      %v662 = vsel %vm541, %v657, 0
      %664 = vmatprep.subr.bf16.mxu0 0
      %665 = vmatpush1.bf16.xpose.msra.mxu0 0
      %666 = vmatprep.subr.bf16.mxu0 0
      %667 = vmatpush1.bf16.xpose.msra.mxu0 0
      %668 = vmatprep.subr.bf16.mxu0 0
      %669 = vmatpush1.bf16.xpose.msra.mxu0 0
      %670 = vmatprep.subr.bf16.mxu0 0
      %671 = vmatpush1.bf16.xpose.msra.mxu0 0
      %672 = vmatprep.subr.bf16.mxu0 0
      %673 = vmatpush1.bf16.xpose.msra.mxu0 0
      %674 = vmatprep.subr.bf16.mxu0 0
      %675 = vmatpush1.bf16.xpose.msra.mxu0 0
      %676 = vmatprep.subr.bf16.mxu0 0
      %677 = vmatpush1.bf16.xpose.msra.mxu0 0
      %678 = vmatprep.subr.bf16.mxu0 0
      %679 = vmatpush1.bf16.xpose.msra.mxu0 %v662
      %680 = vmatprep.subr.bf16.mxu0 0
      %681 = vmatpush2.bf16.xpose.msra.mxu0 0
      %682 = vmatprep.subr.bf16.mxu0 0
      %683 = vmatpush2.bf16.xpose.msra.mxu0 0
      %684 = vmatprep.subr.bf16.mxu0 0
      %685 = vmatpush2.bf16.xpose.msra.mxu0 0
      %686 = vmatprep.subr.bf16.mxu0 0
      %687 = vmatpush2.bf16.xpose.msra.mxu0 0
      %688 = vmatprep.subr.bf16.mxu0 0
      %689 = vmatpush2.bf16.xpose.msra.mxu0 0
      %690 = vmatprep.subr.bf16.mxu0 0
      %691 = vmatpush2.bf16.xpose.msra.mxu0 0
      %692 = vmatprep.subr.bf16.mxu0 0
      %693 = vmatpush2.bf16.xpose.msra.mxu0 0
      %694 = vmatprep.subr.bf16.mxu0 0
      %695 = vmatpush2.bf16.xpose.msra.mxu0 0
      %696 = vmatprep.mubr.bf16.mxu0 0
      %697 = vmatmul.mubr.bf16.gmra.mxu0 %v659
      %v698 = vpop.f32.mrf.mxu0
      %v699 = vadd.f32 0.0, %v698
      %v700 = vpop.f32.mrf.mxu0
      %v701 = vpop.f32.mrf.mxu0
      %v702 = vpop.f32.mrf.mxu0
      %703 = vdwg.mxu0
      %v704 = vsel %vm588, %v699, -inf
      %705 = vmax.xlane.f32.xlu0 %v704
      %v706 = vpop.xlane.xlu0 %705
      %v707 = vsub.f32 %v699, %v706
      %v708 = vmul.f32 %v707, 1.442695
      %v709 = vpow.pop %v708
      %v710 = vsel %vm588, %v709, 0.0
      %711 = vadd.xlane.f32.xlu0 %v710
      %v712 = vpop.xlane.xlu0 %711
      %v713 = vrcp.pop %v712
      %v714 = vmul.f32 %v709, %v713
      %v715 = vpack.c.bf16 %v714, %v714
      %716 = vrot.lane.b32.xlu0 %v537, 56
      %v717 = vpop.permute.xlu0 %716
      %v719 = vsel %vm603, %v715, 0
      %v722 = vand.u32 %v717, %v610
      %724 = vmatprep.subr.bf16.mxu0 0
      %725 = vmatpush1.bf16.msra.mxu0 0
      %726 = vmatprep.subr.bf16.mxu0 0
      %727 = vmatpush1.bf16.msra.mxu0 0
      %728 = vmatprep.subr.bf16.mxu0 0
      %729 = vmatpush1.bf16.msra.mxu0 0
      %730 = vmatprep.subr.bf16.mxu0 0
      %731 = vmatpush1.bf16.msra.mxu0 0
      %732 = vmatprep.subr.bf16.mxu0 0
      %733 = vmatpush1.bf16.msra.mxu0 0
      %734 = vmatprep.subr.bf16.mxu0 0
      %735 = vmatpush1.bf16.msra.mxu0 0
      %736 = vmatprep.subr.bf16.mxu0 0
      %737 = vmatpush1.bf16.msra.mxu0 0
      %738 = vmatprep.subr.bf16.mxu0 0
      %739 = vmatpush1.bf16.msra.mxu0 %v722
      %740 = vmatprep.subr.bf16.mxu0 0
      %741 = vmatpush2.bf16.msra.mxu0 0
      %742 = vmatprep.subr.bf16.mxu0 0
      %743 = vmatpush2.bf16.msra.mxu0 0
      %744 = vmatprep.subr.bf16.mxu0 0
      %745 = vmatpush2.bf16.msra.mxu0 0
      %746 = vmatprep.subr.bf16.mxu0 0
      %747 = vmatpush2.bf16.msra.mxu0 0
      %748 = vmatprep.subr.bf16.mxu0 0
      %749 = vmatpush2.bf16.msra.mxu0 0
      %750 = vmatprep.subr.bf16.mxu0 0
      %751 = vmatpush2.bf16.msra.mxu0 0
      %752 = vmatprep.subr.bf16.mxu0 0
      %753 = vmatpush2.bf16.msra.mxu0 0
      %754 = vmatprep.subr.bf16.mxu0 0
      %755 = vmatpush2.bf16.msra.mxu0 0
      %756 = vmatprep.mubr.bf16.mxu0 0
      %757 = vmatmul.mubr.bf16.gmra.mxu0 %v719
      %v758 = vpop.f32.mrf.mxu0
      %v759 = vadd.f32 0.0, %v758
      %v760 = vpop.f32.mrf.mxu0
      %v761 = vpop.f32.mrf.mxu0
      %v762 = vpop.f32.mrf.mxu0
      %763 = vdwg.mxu0
      %764 = vrot.lane.b32.xlu0 %v537, 112
      %v765 = vpop.permute.xlu0 %764
      %766 = vrot.lane.b32.xlu0 %v537, 80
      %v767 = vpop.permute.xlu0 %766
      %v769 = vsel %vm541, %v765, 0
      %v772 = vsel %vm541, %v767, 0
      %774 = vmatprep.subr.bf16.mxu0 0
      %775 = vmatpush1.bf16.xpose.msra.mxu0 0
      %776 = vmatprep.subr.bf16.mxu0 0
      %777 = vmatpush1.bf16.xpose.msra.mxu0 0
      %778 = vmatprep.subr.bf16.mxu0 0
      %779 = vmatpush1.bf16.xpose.msra.mxu0 0
      %780 = vmatprep.subr.bf16.mxu0 0
      %781 = vmatpush1.bf16.xpose.msra.mxu0 0
      %782 = vmatprep.subr.bf16.mxu0 0
      %783 = vmatpush1.bf16.xpose.msra.mxu0 0
      %784 = vmatprep.subr.bf16.mxu0 0
      %785 = vmatpush1.bf16.xpose.msra.mxu0 0
      %786 = vmatprep.subr.bf16.mxu0 0
      %787 = vmatpush1.bf16.xpose.msra.mxu0 0
      %788 = vmatprep.subr.bf16.mxu0 0
      %789 = vmatpush1.bf16.xpose.msra.mxu0 %v772
      %790 = vmatprep.subr.bf16.mxu0 0
      %791 = vmatpush2.bf16.xpose.msra.mxu0 0
      %792 = vmatprep.subr.bf16.mxu0 0
      %793 = vmatpush2.bf16.xpose.msra.mxu0 0
      %794 = vmatprep.subr.bf16.mxu0 0
      %795 = vmatpush2.bf16.xpose.msra.mxu0 0
      %796 = vmatprep.subr.bf16.mxu0 0
      %797 = vmatpush2.bf16.xpose.msra.mxu0 0
      %798 = vmatprep.subr.bf16.mxu0 0
      %799 = vmatpush2.bf16.xpose.msra.mxu0 0
      %800 = vmatprep.subr.bf16.mxu0 0
      %801 = vmatpush2.bf16.xpose.msra.mxu0 0
      %802 = vmatprep.subr.bf16.mxu0 0
      %803 = vmatpush2.bf16.xpose.msra.mxu0 0
      %804 = vmatprep.subr.bf16.mxu0 0
      %805 = vmatpush2.bf16.xpose.msra.mxu0 0
      %806 = vmatprep.mubr.bf16.mxu0 0
      %807 = vmatmul.mubr.bf16.gmra.mxu0 %v769
      %v808 = vpop.f32.mrf.mxu0
      %v809 = vadd.f32 0.0, %v808
      %v810 = vpop.f32.mrf.mxu0
      %v811 = vpop.f32.mrf.mxu0
      %v812 = vpop.f32.mrf.mxu0
      %813 = vdwg.mxu0
      %v814 = vsel %vm588, %v809, -inf
      %815 = vmax.xlane.f32.xlu0 %v814
      %v816 = vpop.xlane.xlu0 %815
      %v817 = vsub.f32 %v809, %v816
      %v818 = vmul.f32 %v817, 1.442695
      %v819 = vpow.pop %v818
      %v820 = vsel %vm588, %v819, 0.0
      %821 = vadd.xlane.f32.xlu0 %v820
      %v822 = vpop.xlane.xlu0 %821
      %v823 = vrcp.pop %v822
      %v824 = vmul.f32 %v819, %v823
      %v825 = vpack.c.bf16 %v824, %v824
      %826 = vrot.lane.b32.xlu0 %v537, 48
      %v827 = vpop.permute.xlu0 %826
      %v829 = vsel %vm603, %v825, 0
      %v832 = vand.u32 %v827, %v610
      %834 = vmatprep.subr.bf16.mxu0 0
      %835 = vmatpush1.bf16.msra.mxu0 0
      %836 = vmatprep.subr.bf16.mxu0 0
      %837 = vmatpush1.bf16.msra.mxu0 0
      %838 = vmatprep.subr.bf16.mxu0 0
      %839 = vmatpush1.bf16.msra.mxu0 0
      %840 = vmatprep.subr.bf16.mxu0 0
      %841 = vmatpush1.bf16.msra.mxu0 0
      %842 = vmatprep.subr.bf16.mxu0 0
      %843 = vmatpush1.bf16.msra.mxu0 0
      %844 = vmatprep.subr.bf16.mxu0 0
      %845 = vmatpush1.bf16.msra.mxu0 0
      %846 = vmatprep.subr.bf16.mxu0 0
      %847 = vmatpush1.bf16.msra.mxu0 0
      %848 = vmatprep.subr.bf16.mxu0 0
      %849 = vmatpush1.bf16.msra.mxu0 %v832
      %850 = vmatprep.subr.bf16.mxu0 0
      %851 = vmatpush2.bf16.msra.mxu0 0
      %852 = vmatprep.subr.bf16.mxu0 0
      %853 = vmatpush2.bf16.msra.mxu0 0
      %854 = vmatprep.subr.bf16.mxu0 0
      %855 = vmatpush2.bf16.msra.mxu0 0
      %856 = vmatprep.subr.bf16.mxu0 0
      %857 = vmatpush2.bf16.msra.mxu0 0
      %858 = vmatprep.subr.bf16.mxu0 0
      %859 = vmatpush2.bf16.msra.mxu0 0
      %860 = vmatprep.subr.bf16.mxu0 0
      %861 = vmatpush2.bf16.msra.mxu0 0
      %862 = vmatprep.subr.bf16.mxu0 0
      %863 = vmatpush2.bf16.msra.mxu0 0
      %864 = vmatprep.subr.bf16.mxu0 0
      %865 = vmatpush2.bf16.msra.mxu0 0
      %866 = vmatprep.mubr.bf16.mxu0 0
      %867 = vmatmul.mubr.bf16.gmra.mxu0 %v829
      %v868 = vpop.f32.mrf.mxu0
      %v869 = vadd.f32 0.0, %v868
      %v870 = vpop.f32.mrf.mxu0
      %v871 = vpop.f32.mrf.mxu0
      %v872 = vpop.f32.mrf.mxu0
      %873 = vdwg.mxu0
      %874 = vrot.lane.b32.xlu0 %v537, 104
      %v875 = vpop.permute.xlu0 %874
      %876 = vrot.lane.b32.xlu0 %v537, 72
      %v877 = vpop.permute.xlu0 %876
      %v879 = vsel %vm541, %v875, 0
      %v882 = vsel %vm541, %v877, 0
      %884 = vmatprep.subr.bf16.mxu0 0
      %885 = vmatpush1.bf16.xpose.msra.mxu0 0
      %886 = vmatprep.subr.bf16.mxu0 0
      %887 = vmatpush1.bf16.xpose.msra.mxu0 0
      %888 = vmatprep.subr.bf16.mxu0 0
      %889 = vmatpush1.bf16.xpose.msra.mxu0 0
      %890 = vmatprep.subr.bf16.mxu0 0
      %891 = vmatpush1.bf16.xpose.msra.mxu0 0
      %892 = vmatprep.subr.bf16.mxu0 0
      %893 = vmatpush1.bf16.xpose.msra.mxu0 0
      %894 = vmatprep.subr.bf16.mxu0 0
      %895 = vmatpush1.bf16.xpose.msra.mxu0 0
      %896 = vmatprep.subr.bf16.mxu0 0
      %897 = vmatpush1.bf16.xpose.msra.mxu0 0
      %898 = vmatprep.subr.bf16.mxu0 0
      %899 = vmatpush1.bf16.xpose.msra.mxu0 %v882
      %900 = vmatprep.subr.bf16.mxu0 0
      %901 = vmatpush2.bf16.xpose.msra.mxu0 0
      %902 = vmatprep.subr.bf16.mxu0 0
      %903 = vmatpush2.bf16.xpose.msra.mxu0 0
      %904 = vmatprep.subr.bf16.mxu0 0
      %905 = vmatpush2.bf16.xpose.msra.mxu0 0
      %906 = vmatprep.subr.bf16.mxu0 0
      %907 = vmatpush2.bf16.xpose.msra.mxu0 0
      %908 = vmatprep.subr.bf16.mxu0 0
      %909 = vmatpush2.bf16.xpose.msra.mxu0 0
      %910 = vmatprep.subr.bf16.mxu0 0
      %911 = vmatpush2.bf16.xpose.msra.mxu0 0
      %912 = vmatprep.subr.bf16.mxu0 0
      %913 = vmatpush2.bf16.xpose.msra.mxu0 0
      %914 = vmatprep.subr.bf16.mxu0 0
      %915 = vmatpush2.bf16.xpose.msra.mxu0 0
      %916 = vmatprep.mubr.bf16.mxu0 0
      %917 = vmatmul.mubr.bf16.gmra.mxu0 %v879
      %v918 = vpop.f32.mrf.mxu0
      %v919 = vadd.f32 0.0, %v918
      %v920 = vpop.f32.mrf.mxu0
      %v921 = vpop.f32.mrf.mxu0
      %v922 = vpop.f32.mrf.mxu0
      %923 = vdwg.mxu0
      %v924 = vsel %vm588, %v919, -inf
      %925 = vmax.xlane.f32.xlu0 %v924
      %v926 = vpop.xlane.xlu0 %925
      %v927 = vsub.f32 %v919, %v926
      %v928 = vmul.f32 %v927, 1.442695
      %v929 = vpow.pop %v928
      %v930 = vsel %vm588, %v929, 0.0
      %931 = vadd.xlane.f32.xlu0 %v930
      %v932 = vpop.xlane.xlu0 %931
      %v933 = vrcp.pop %v932
      %v934 = vmul.f32 %v929, %v933
      %v935 = vpack.c.bf16 %v934, %v934
      %936 = vrot.lane.b32.xlu0 %v537, 40
      %v937 = vpop.permute.xlu0 %936
      %v939 = vsel %vm603, %v935, 0
      %v942 = vand.u32 %v937, %v610
      %944 = vmatprep.subr.bf16.mxu0 0
      %945 = vmatpush1.bf16.msra.mxu0 0
      %946 = vmatprep.subr.bf16.mxu0 0
      %947 = vmatpush1.bf16.msra.mxu0 0
      %948 = vmatprep.subr.bf16.mxu0 0
      %949 = vmatpush1.bf16.msra.mxu0 0
      %950 = vmatprep.subr.bf16.mxu0 0
      %951 = vmatpush1.bf16.msra.mxu0 0
      %952 = vmatprep.subr.bf16.mxu0 0
      %953 = vmatpush1.bf16.msra.mxu0 0
      %954 = vmatprep.subr.bf16.mxu0 0
      %955 = vmatpush1.bf16.msra.mxu0 0
      %956 = vmatprep.subr.bf16.mxu0 0
      %957 = vmatpush1.bf16.msra.mxu0 0
      %958 = vmatprep.subr.bf16.mxu0 0
      %959 = vmatpush1.bf16.msra.mxu0 %v942
      %960 = vmatprep.subr.bf16.mxu0 0
      %961 = vmatpush2.bf16.msra.mxu0 0
      %962 = vmatprep.subr.bf16.mxu0 0
      %963 = vmatpush2.bf16.msra.mxu0 0
      %964 = vmatprep.subr.bf16.mxu0 0
      %965 = vmatpush2.bf16.msra.mxu0 0
      %966 = vmatprep.subr.bf16.mxu0 0
      %967 = vmatpush2.bf16.msra.mxu0 0
      %968 = vmatprep.subr.bf16.mxu0 0
      %969 = vmatpush2.bf16.msra.mxu0 0
      %970 = vmatprep.subr.bf16.mxu0 0
      %971 = vmatpush2.bf16.msra.mxu0 0
      %972 = vmatprep.subr.bf16.mxu0 0
      %973 = vmatpush2.bf16.msra.mxu0 0
      %974 = vmatprep.subr.bf16.mxu0 0
      %975 = vmatpush2.bf16.msra.mxu0 0
      %976 = vmatprep.mubr.bf16.mxu0 0
      %977 = vmatmul.mubr.bf16.gmra.mxu0 %v939
      %v978 = vpop.f32.mrf.mxu0
      %v979 = vadd.f32 0.0, %v978
      %v980 = vpop.f32.mrf.mxu0
      %v981 = vpop.f32.mrf.mxu0
      %v982 = vpop.f32.mrf.mxu0
      %983 = vdwg.mxu0
      %985 = vrot.lane.b32.xlu0 %v759, 8
      %v986 = vpop.permute.xlu0 %985
      %989 = vrot.lane.b32.xlu0 %v869, 16
      %v990 = vpop.permute.xlu0 %989
      %993 = vrot.lane.b32.xlu0 %v979, 24
      %v994 = vpop.permute.xlu0 %993
      %v996 = vsel %vm541, %v649, %v986
      %vm997 = vcmask 130048
      %v998 = vsel %vm997, %v996, %v990
      %vm999 = vcmask 195584
      %v1000 = vsel %vm999, %v998, %v994
      %v1001 = vpack.c.bf16 %v1000, %v1000
      %v1002 = vld [vmem:[%s5] sm:$0xf]
      %v1003 = vld [vmem:[%s5 + $0x4] sm:$0xf]
      %v1004 = vld [vmem:[%s5 + $0x8] sm:$0xf]
      %v1005 = vld [vmem:[%s5 + $0xc] sm:$0xf]
      %v1006 = vld [vmem:[%s6] sm:$0x1]
      %v1008 = vlaneseq
      %v1009 = vshrl.u32 %v1008, 7
      %v1010 = vsub.s32 0, %v1009
      %v1011 = vrot.slane %v1006, %v1010
      %v1017 = vunpack.c.l.b16 %v1002
      %v1018 = vunpack.c.l.b16 %v1003
      %v1019 = vunpack.c.l.b16 %v1004
      %v1020 = vunpack.c.l.b16 %v1005
      %v1021 = vpack.c.b16 %v1018, %v1017
      %v1022 = vpack.c.b16 %v1020, %v1019
      %v1026 = vsel %vm493, %v1001, 0
      %1028 = vmatprep.subr.bf16.mxu0 0
      %1029 = vmatpush1.bf16.msra.mxu0 0
      %1030 = vmatprep.subr.bf16.mxu0 0
      %1031 = vmatpush1.bf16.msra.mxu0 0
      %1032 = vmatprep.subr.bf16.mxu0 0
      %1033 = vmatpush1.bf16.msra.mxu0 0
      %1034 = vmatprep.subr.bf16.mxu0 0
      %1035 = vmatpush1.bf16.msra.mxu0 0
      %1036 = vmatprep.subr.bf16.mxu0 0
      %1037 = vmatpush1.bf16.msra.mxu0 0
      %1038 = vmatprep.subr.bf16.mxu0 0
      %1039 = vmatpush1.bf16.msra.mxu0 0
      %1040 = vmatprep.subr.bf16.mxu0 0
      %1041 = vmatpush1.bf16.msra.mxu0 %v1022
      %1042 = vmatprep.subr.bf16.mxu0 0
      %1043 = vmatpush1.bf16.msra.mxu0 %v1021
      %1044 = vmatprep.subr.bf16.mxu0 0
      %1045 = vmatpush2.bf16.msra.mxu0 0
      %1046 = vmatprep.subr.bf16.mxu0 0
      %1047 = vmatpush2.bf16.msra.mxu0 0
      %1048 = vmatprep.subr.bf16.mxu0 0
      %1049 = vmatpush2.bf16.msra.mxu0 0
      %1050 = vmatprep.subr.bf16.mxu0 0
      %1051 = vmatpush2.bf16.msra.mxu0 0
      %1052 = vmatprep.subr.bf16.mxu0 0
      %1053 = vmatpush2.bf16.msra.mxu0 0
      %1054 = vmatprep.subr.bf16.mxu0 0
      %1055 = vmatpush2.bf16.msra.mxu0 0
      %1056 = vmatprep.subr.bf16.mxu0 0
      %1057 = vmatpush2.bf16.msra.mxu0 0
      %1058 = vmatprep.subr.bf16.mxu0 0
      %1059 = vmatpush2.bf16.msra.mxu0 0
      %1060 = vmatprep.mubr.bf16.mxu0 0
      %1061 = vmatmul.mubr.bf16.gmra.mxu0 %v1026
      %v1062 = vpop.f32.mrf.mxu0
      %v1063 = vadd.f32 %v1011, %v1062
      %v1064 = vpop.f32.mrf.mxu0
      %v1065 = vpop.f32.mrf.mxu0
      %v1066 = vpop.f32.mrf.mxu0
      %1067 = vdwg.mxu0
      %v1068 = vadd.f32 %v437, %v1063
      %v1069 = vld [vmem:[%s7] sm:$0x1]
      %v1070 = vld [vmem:[%s8] sm:$0x1]
      %v1071 = vsel %vm440, %v1068, 0.0
      %1072 = vadd.xlane.f32.xlu0 %v1071
      %v1073 = vpop.xlane.xlu0 %1072
      %v1074 = vmul.f32 %v1073, %v444
      %v1075 = vsub.f32 %v1068, %v1074
      %v1076 = vmul.f32 %v1075, %v1075
      %v1077 = vsel %vm440, %v1076, 0.0
      %1078 = vadd.xlane.f32.xlu0 %v1077
      %v1079 = vpop.xlane.xlu0 %1078
      %v1080 = vmul.f32 %v1079, %v444
      %v1081 = vadd.f32 %v1080, 1e-05
      %v1082 = vrsqrt.pop %v1081
      %v1083 = vmul.f32 %v1075, %v1082
      %v1085 = vlaneseq
      %v1086 = vshrl.u32 %v1085, 7
      %v1087 = vsub.s32 0, %v1086
      %v1088 = vrot.slane %v1069, %v1087
      %v1090 = vmul.f32 %v1083, %v1088
      %v1092 = vlaneseq
      %v1093 = vshrl.u32 %v1092, 7
      %v1094 = vsub.s32 0, %v1093
      %v1095 = vrot.slane %v1070, %v1094
      %v1097 = vadd.f32 %v1090, %v1095
      %v1098 = vpack.c.bf16 %v1097, %v1097
      %v1099 = vld [vmem:[%s9] sm:$0xf]
      %v1100 = vld [vmem:[%s9 + $0x4] sm:$0xf]
      %v1101 = vld [vmem:[%s9 + $0x8] sm:$0xf]
      %v1102 = vld [vmem:[%s9 + $0xc] sm:$0xf]
      %v1103 = vld [vmem:[%s10] sm:$0x1]
      %v1105 = vlaneseq
      %v1106 = vshrl.u32 %v1105, 7
      %v1107 = vsub.s32 0, %v1106
      %v1108 = vrot.slane %v1103, %v1107
      %v1114 = vunpack.c.l.b16 %v1099
      %v1115 = vunpack.c.l.b16 %v1100
      %v1116 = vunpack.c.l.b16 %v1101
      %v1117 = vunpack.c.l.b16 %v1102
      %v1118 = vpack.c.b16 %v1115, %v1114
      %v1119 = vpack.c.b16 %v1117, %v1116
      %v1123 = vsel %vm493, %v1098, 0
      %1125 = vmatprep.subr.bf16.mxu0 0
      %1126 = vmatpush1.bf16.msra.mxu0 0
      %1127 = vmatprep.subr.bf16.mxu0 0
      %1128 = vmatpush1.bf16.msra.mxu0 0
      %1129 = vmatprep.subr.bf16.mxu0 0
      %1130 = vmatpush1.bf16.msra.mxu0 0
      %1131 = vmatprep.subr.bf16.mxu0 0
      %1132 = vmatpush1.bf16.msra.mxu0 0
      %1133 = vmatprep.subr.bf16.mxu0 0
      %1134 = vmatpush1.bf16.msra.mxu0 0
      %1135 = vmatprep.subr.bf16.mxu0 0
      %1136 = vmatpush1.bf16.msra.mxu0 0
      %1137 = vmatprep.subr.bf16.mxu0 0
      %1138 = vmatpush1.bf16.msra.mxu0 %v1119
      %1139 = vmatprep.subr.bf16.mxu0 0
      %1140 = vmatpush1.bf16.msra.mxu0 %v1118
      %1141 = vmatprep.subr.bf16.mxu0 0
      %1142 = vmatpush2.bf16.msra.mxu0 0
      %1143 = vmatprep.subr.bf16.mxu0 0
      %1144 = vmatpush2.bf16.msra.mxu0 0
      %1145 = vmatprep.subr.bf16.mxu0 0
      %1146 = vmatpush2.bf16.msra.mxu0 0
      %1147 = vmatprep.subr.bf16.mxu0 0
      %1148 = vmatpush2.bf16.msra.mxu0 0
      %1149 = vmatprep.subr.bf16.mxu0 0
      %1150 = vmatpush2.bf16.msra.mxu0 0
      %1151 = vmatprep.subr.bf16.mxu0 0
      %1152 = vmatpush2.bf16.msra.mxu0 0
      %1153 = vmatprep.subr.bf16.mxu0 0
      %1154 = vmatpush2.bf16.msra.mxu0 0
      %1155 = vmatprep.subr.bf16.mxu0 0
      %1156 = vmatpush2.bf16.msra.mxu0 0
      %1157 = vmatprep.mubr.bf16.mxu0 0
      %1158 = vmatmul.mubr.bf16.gmra.mxu0 %v1123
      %v1159 = vpop.f32.mrf.mxu0
      %v1160 = vadd.f32 %v1108, %v1159
      %v1161 = vpop.f32.mrf.mxu0
      %v1162 = vpop.f32.mrf.mxu0
      %v1163 = vpop.f32.mrf.mxu0
      %1164 = vdwg.mxu0
      %v1165 = vmul.f32 %v1160, 1.702
      %v1166 = vxor.u32 %v1165, 2147483648
      %v1167 = vmul.f32 %v1166, 1.442695
      %v1168 = vpow.pop %v1167
      %v1169 = vadd.f32 %v1168, 1.0
      %v1170 = vrcp.pop %v1169
      %v1171 = vmul.f32 1.0, %v1170
      %v1172 = vmul.f32 %v1160, %v1171
      %v1173 = vpack.c.bf16 %v1172, %v1172
      %v1174 = vld [vmem:[%s11] sm:$0xf]
      %v1175 = vld [vmem:[%s11 + $0x4] sm:$0xf]
      %v1176 = vld [vmem:[%s11 + $0x8] sm:$0xf]
      %v1177 = vld [vmem:[%s11 + $0xc] sm:$0xf]
      %v1178 = vld [vmem:[%s11 + $0x10] sm:$0xf]
      %v1179 = vld [vmem:[%s11 + $0x14] sm:$0xf]
      %v1180 = vld [vmem:[%s11 + $0x18] sm:$0xf]
      %v1181 = vld [vmem:[%s11 + $0x1c] sm:$0xf]
      %v1182 = vld [vmem:[%s11 + $0x20] sm:$0xf]
      %v1183 = vld [vmem:[%s11 + $0x24] sm:$0xf]
      %v1184 = vld [vmem:[%s11 + $0x28] sm:$0xf]
      %v1185 = vld [vmem:[%s11 + $0x2c] sm:$0xf]
      %v1186 = vld [vmem:[%s11 + $0x30] sm:$0xf]
      %v1187 = vld [vmem:[%s11 + $0x34] sm:$0xf]
      %v1188 = vld [vmem:[%s11 + $0x38] sm:$0xf]
      %v1189 = vld [vmem:[%s11 + $0x3c] sm:$0xf]
      %v1190 = vld [vmem:[%s12] sm:$0x1]
      %v1192 = vlaneseq
      %v1193 = vshrl.u32 %v1192, 7
      %v1194 = vsub.s32 0, %v1193
      %v1195 = vrot.slane %v1190, %v1194
      %v1213 = vunpack.c.l.b16 %v1174
      %v1214 = vunpack.c.l.b16 %v1175
      %v1215 = vunpack.c.l.b16 %v1176
      %v1216 = vunpack.c.l.b16 %v1177
      %v1217 = vunpack.c.l.b16 %v1178
      %v1218 = vunpack.c.l.b16 %v1179
      %v1219 = vunpack.c.l.b16 %v1180
      %v1220 = vunpack.c.l.b16 %v1181
      %v1221 = vunpack.c.l.b16 %v1182
      %v1222 = vunpack.c.l.b16 %v1183
      %v1223 = vunpack.c.l.b16 %v1184
      %v1224 = vunpack.c.l.b16 %v1185
      %v1225 = vunpack.c.l.b16 %v1186
      %v1226 = vunpack.c.l.b16 %v1187
      %v1227 = vunpack.c.l.b16 %v1188
      %v1228 = vunpack.c.l.b16 %v1189
      %v1229 = vpack.c.b16 %v1214, %v1213
      %v1230 = vpack.c.b16 %v1216, %v1215
      %v1231 = vpack.c.b16 %v1218, %v1217
      %v1232 = vpack.c.b16 %v1220, %v1219
      %v1233 = vpack.c.b16 %v1222, %v1221
      %v1234 = vpack.c.b16 %v1224, %v1223
      %v1235 = vpack.c.b16 %v1226, %v1225
      %v1236 = vpack.c.b16 %v1228, %v1227
      %1245 = vmatprep.subr.bf16.mxu0 0
      %1246 = vmatpush1.bf16.msra.mxu0 %v1236
      %1247 = vmatprep.subr.bf16.mxu0 0
      %1248 = vmatpush1.bf16.msra.mxu0 %v1235
      %1249 = vmatprep.subr.bf16.mxu0 0
      %1250 = vmatpush1.bf16.msra.mxu0 %v1234
      %1251 = vmatprep.subr.bf16.mxu0 0
      %1252 = vmatpush1.bf16.msra.mxu0 %v1233
      %1253 = vmatprep.subr.bf16.mxu0 0
      %1254 = vmatpush1.bf16.msra.mxu0 %v1232
      %1255 = vmatprep.subr.bf16.mxu0 0
      %1256 = vmatpush1.bf16.msra.mxu0 %v1231
      %1257 = vmatprep.subr.bf16.mxu0 0
      %1258 = vmatpush1.bf16.msra.mxu0 %v1230
      %1259 = vmatprep.subr.bf16.mxu0 0
      %1260 = vmatpush1.bf16.msra.mxu0 %v1229
      %1261 = vmatprep.subr.bf16.mxu0 0
      %1262 = vmatpush2.bf16.msra.mxu0 0
      %1263 = vmatprep.subr.bf16.mxu0 0
      %1264 = vmatpush2.bf16.msra.mxu0 0
      %1265 = vmatprep.subr.bf16.mxu0 0
      %1266 = vmatpush2.bf16.msra.mxu0 0
      %1267 = vmatprep.subr.bf16.mxu0 0
      %1268 = vmatpush2.bf16.msra.mxu0 0
      %1269 = vmatprep.subr.bf16.mxu0 0
      %1270 = vmatpush2.bf16.msra.mxu0 0
      %1271 = vmatprep.subr.bf16.mxu0 0
      %1272 = vmatpush2.bf16.msra.mxu0 0
      %1273 = vmatprep.subr.bf16.mxu0 0
      %1274 = vmatpush2.bf16.msra.mxu0 0
      %1275 = vmatprep.subr.bf16.mxu0 0
      %1276 = vmatpush2.bf16.msra.mxu0 0
      %1277 = vmatprep.mubr.bf16.mxu0 0
      %1278 = vmatmul.mubr.bf16.gmra.mxu0 %v1173
      %v1279 = vpop.f32.mrf.mxu0
      %v1280 = vadd.f32 %v1195, %v1279
      %v1281 = vpop.f32.mrf.mxu0
      %v1282 = vpop.f32.mrf.mxu0
      %v1283 = vpop.f32.mrf.mxu0
      %1284 = vdwg.mxu0
      %v1285 = vadd.f32 %v1068, %v1280
      %1286 = vst.msk [vmem:[%s435] sm:$0x1f] %vm440, %v1285
      %p1287 = scmp.lt.s32.totalorder %s24, 1
      %s1288 = scalar_select %p1287, %s24, 1
      %s1289 = smul.addr %s1288, 8
      %s1290 = scalar_lea.vmem %s13, %s1289
      // Predicated region
      $region73: #{encoder_forward.5} parent=71 // pred_check
        %p1291 = pneg %p320
      $region74: #{encoder_forward.5} parent=71 // pred_check_branch
        %1293 = sbr.rel (%p1291) target = $region76
      $region75: #{encoder_forward.5} parent=71 // pred_region
        _
      $region76: #{encoder_forward.5} parent=71 // pred_fallthru
        _
    $region72: #{encoder_forward.5} parent=5 // pred_fallthru
      _
    %p1294 = scmp.le.s32.totalorder 2, %s19
    // Predicated region
    $region77: #{encoder_forward.5} parent=5 // pred_check
      %p1295 = pneg %p1294
    $region78: #{encoder_forward.5} parent=5 // pred_check_branch
      %1297 = sbr.rel (%p1295) target = $region80
    $region79: #{encoder_forward.5} parent=5 // pred_region
      %s1298 = ssub.s32 %s19, 2
      // Predicated region
      $region81: #{encoder_forward.5} parent=79 // pred_check
        %p1299 = pneg %p326
      $region82: #{encoder_forward.5} parent=79 // pred_check_branch
        %1301 = sbr.rel (%p1299) target = $region84
      $region83: #{encoder_forward.5} parent=79 // pred_region
        %p1302 = scmp.lt.s32.totalorder %s25, 1
        %s1303 = scalar_select %p1302, %s25, 1
        %s1304 = smul.addr %s1303, 8
        %s1305 = scalar_lea.vmem %s13, %s1304
      $region84: #{encoder_forward.5} parent=79 // pred_fallthru
        _
    $region80: #{encoder_forward.5} parent=5 // pred_fallthru
      _
  $region6: #{encoder_forward.5} parent=0 // loop_footer
    %s23 = sadd.s32 1, %s19
  $region7: #{encoder_forward.5} parent=0 // loop_footer_branch
    %18 = sbr.rel target = $region3
  $region8: #{encoder_forward.5} parent=0 // loop_exit
    _

</llo_original>
